<compile_context>
chip_gen: v7x
topology: tpu7x:2x2x1
jax: 0.10.0
libtpu: 0.0.40
codegen_flags: <defaults>
</compile_context>

<pallas_src>
import functools

import jax
import jax.numpy as jnp
from jax.experimental import pallas as pl
from jax.experimental.pallas import tpu as pltpu


def _pick_row_tile(m):
    """Largest row tile: whole array for small M, else a 128-multiple."""
    if m <= 512:
        return m
    for t in (512, 256, 128, 8):
        if m % t == 0:
            return t
    return m


# ----------------------------------------------------------------------------
# Kernel 1: fused embedding lookup + linear + tanh (encoder and decoder stems)
#   embedding gather is done as one-hot @ table on the MXU (vocab is small);
#   TODO(synk): for large vocabs switch to PrefetchScalarGridSpec + pl.Element
#   row gather instead of the one-hot matmul.
# ----------------------------------------------------------------------------
def _embed_linear_tanh_kernel(tok_ref, table_ref, w_ref, b_ref, o_ref):
    # tok_ref: (TM, 1) int32, table_ref: (V, E) bf16, w_ref: (E, H) bf16,
    # b_ref: (1, H) f32, o_ref: (TM, H) bf16
    tm = tok_ref.shape[0]
    vocab = table_ref.shape[0]
    ids = tok_ref[...]                                              # (TM, 1)
    col = jax.lax.broadcasted_iota(jnp.int32, (tm, vocab), 1)       # (TM, V)
    onehot = jnp.where(col == ids, 1.0, 0.0).astype(jnp.bfloat16)   # (TM, V)
    emb = jnp.dot(onehot, table_ref[...],
                  preferred_element_type=jnp.float32)               # (TM, E) f32
    h = jnp.dot(emb.astype(jnp.bfloat16), w_ref[...],
                preferred_element_type=jnp.float32) + b_ref[...]    # (TM, H) f32
    o_ref[...] = jnp.tanh(h).astype(o_ref.dtype)


def embed_linear_tanh(tokens, table, w, b):
    m = tokens.shape[0]
    tm = _pick_row_tile(m)
    vocab, e = table.shape
    h = w.shape[1]
    tok2d = tokens.reshape(m, 1).astype(jnp.int32)
    return pl.pallas_call(
        _embed_linear_tanh_kernel,
        out_shape=jax.ShapeDtypeStruct((m, h), jnp.bfloat16),
        grid=(m // tm,),
        in_specs=[
            pl.BlockSpec((tm, 1), lambda i: (i, 0)),
            pl.BlockSpec((vocab, e), lambda i: (0, 0)),
            pl.BlockSpec((e, h), lambda i: (0, 0)),
            pl.BlockSpec((1, h), lambda i: (0, 0)),
        ],
        out_specs=pl.BlockSpec((tm, h), lambda i: (i, 0)),
        compiler_params=pltpu.CompilerParams(dimension_semantics=("parallel",)),
    )(tok2d, table, w, b)


# ----------------------------------------------------------------------------
# Kernel 2: per-batch cross-attention context, h = q + softmax(q kv^T) kv
#   src_lengths is scalar-prefetched and used to mask padded source positions.
#   (No causal mask: this is pure cross-attention with teacher forcing.)
# ----------------------------------------------------------------------------
def _attn_ctx_kernel(lens_ref, q_ref, kv_ref, h_ref, *, scale):
    b = pl.program_id(0)
    q = q_ref[0]                                                    # (T, H) bf16
    kv = kv_ref[0]                                                  # (S, H) bf16
    q_scaled = (q.astype(jnp.float32) * scale).astype(jnp.bfloat16)

    # scores: contract H of q against H of kv (no materialized transpose)
    s = jax.lax.dot_general(
        q_scaled, kv, (((1,), (1,)), ((), ())),
        preferred_element_type=jnp.float32)                         # (T, S) f32

    # mask padded source positions beyond src_lengths[b]
    t, src = s.shape
    length = lens_ref[b]
    col = jax.lax.broadcasted_iota(jnp.int32, (t, src), 1)
    s = jnp.where(col < length, s, -1e30)

    # numerically-stable softmax over source positions (f32 on the VPU/EUP)
    m = jnp.max(s, axis=-1, keepdims=True)
    p = jnp.exp(s - m)
    denom = jnp.sum(p, axis=-1, keepdims=True)
    attn = p * pl.reciprocal(denom, approx=True)                    # (T, S)

    ctx = jnp.dot(attn.astype(jnp.bfloat16), kv,
                  preferred_element_type=jnp.float32)               # (T, H) f32
    h_ref[0] = (q.astype(jnp.float32) + ctx).astype(h_ref.dtype)


def attention_context(q, src_out, src_lengths):
    bsz, t, h = q.shape
    s = src_out.shape[1]
    scale = 1.0 / float(h) ** 0.5
    kernel = functools.partial(_attn_ctx_kernel, scale=scale)
    return pl.pallas_call(
        kernel,
        out_shape=jax.ShapeDtypeStruct((bsz, t, h), jnp.bfloat16),
        grid_spec=pltpu.PrefetchScalarGridSpec(
            num_scalar_prefetch=1,
            grid=(bsz,),
            in_specs=[
                pl.BlockSpec((1, t, h), lambda b, lens: (b, 0, 0)),
                pl.BlockSpec((1, s, h), lambda b, lens: (b, 0, 0)),
            ],
            out_specs=pl.BlockSpec((1, t, h), lambda b, lens: (b, 0, 0)),
        ),
        compiler_params=pltpu.CompilerParams(dimension_semantics=("parallel",)),
    )(src_lengths.astype(jnp.int32), q, src_out)


# ----------------------------------------------------------------------------
# Kernel 3: combine + vocab projection on flattened [B*T, H] rows
#   logits = tanh(h @ W_comb) @ W_out  -- one fat matmul pair, not per-batch.
#   TODO(synk): for large vocabs tile W_out over V with an extra parallel axis.
# ----------------------------------------------------------------------------
def _combine_project_kernel(h_ref, wc_ref, wo_ref, o_ref):
    comb = jnp.tanh(jnp.dot(h_ref[...], wc_ref[...],
                            preferred_element_type=jnp.float32))    # (TM, H) f32
    o_ref[...] = jnp.dot(comb.astype(jnp.bfloat16), wo_ref[...],
                         preferred_element_type=jnp.float32)        # (TM, V) f32


def combine_project(h, w_comb, w_out):
    m, hid = h.shape
    v = w_out.shape[1]
    tm = _pick_row_tile(m)
    return pl.pallas_call(
        _combine_project_kernel,
        out_shape=jax.ShapeDtypeStruct((m, v), jnp.float32),
        grid=(m // tm,),
        in_specs=[
            pl.BlockSpec((tm, hid), lambda i: (i, 0)),
            pl.BlockSpec((hid, hid), lambda i: (0, 0)),
            pl.BlockSpec((hid, v), lambda i: (0, 0)),
        ],
        out_specs=pl.BlockSpec((tm, v), lambda i: (i, 0)),
        compiler_params=pltpu.CompilerParams(dimension_semantics=("parallel",)),
    )(h, w_comb, w_out)


# ----------------------------------------------------------------------------
# Seq2SeqModel forward (mirrors the PyTorch control flow)
# ----------------------------------------------------------------------------
def seq2seq_encoder(params, src_tokens, src_lengths):
    bsz, s = src_tokens.shape
    hid = params["enc_w"].shape[1]
    src_out = embed_linear_tanh(
        src_tokens.reshape(bsz * s),
        params["enc_embed"], params["enc_w"], params["enc_b"],
    ).reshape(bsz, s, hid)
    # matches `src_out, _, _ = encoder_out['src_out']` in Seq2SeqModel.forward
    return {"src_out": (src_out, src_lengths, src_tokens)}


def seq2seq_decoder(params, tgt_inputs, encoder_out):
    src_out, src_lengths, _ = encoder_out["src_out"]
    bsz, t = tgt_inputs.shape
    hid = params["dec_w"].shape[1]
    q = embed_linear_tanh(
        tgt_inputs.reshape(bsz * t),
        params["dec_embed"], params["dec_w"], params["dec_b"],
    ).reshape(bsz, t, hid)
    h = attention_context(q, src_out, src_lengths)                   # [B,T,H] bf16
    v = params["w_out"].shape[1]
    logits = combine_project(
        h.reshape(bsz * t, hid), params["w_comb"], params["w_out"]
    ).reshape(bsz, t, v)
    return logits


@jax.jit
def seq2seq_model_forward(params, src_tokens, src_lengths, tgt_inputs):
    encoder_out = seq2seq_encoder(params, src_tokens, src_lengths)
    src_out, _, _ = encoder_out["src_out"]   # mirrors reference forward
    del src_out
    decoder_out = seq2seq_decoder(params, tgt_inputs, encoder_out)
    return decoder_out


# ----------------------------------------------------------------------------
# Deterministic parameter init (synthetic; no checkpoint loading)
#   weights/tables in bf16 (MXU inputs), biases in f32.
# ----------------------------------------------------------------------------
def init_params(key, vocab=256, embed=128, hidden=128):
    ks = jax.random.split(key, 8)
    scale = 0.02
    bf16 = jnp.bfloat16
    return {
        "enc_embed": (scale * jax.random.normal(ks[0], (vocab, embed))).astype(bf16),
        "enc_w":     (scale * jax.random.normal(ks[1], (embed, hidden))).astype(bf16),
        "enc_b":     jnp.zeros((1, hidden), jnp.float32),
        "dec_embed": (scale * jax.random.normal(ks[2], (vocab, embed))).astype(bf16),
        "dec_w":     (scale * jax.random.normal(ks[3], (embed, hidden))).astype(bf16),
        "dec_b":     jnp.zeros((1, hidden), jnp.float32),
        "w_comb":    (scale * jax.random.normal(ks[4], (hidden, hidden))).astype(bf16),
        "w_out":     (scale * jax.random.normal(ks[5], (hidden, vocab))).astype(bf16),
    }


if __name__ == "__main__":
    B, S_SRC, T_TGT = 2, 8, 8
    VOCAB, EMBED, HIDDEN = 256, 128, 128

    root = jax.random.PRNGKey(0)
    k_params, k_src, k_tgt = jax.random.split(root, 3)

    params = init_params(k_params, vocab=VOCAB, embed=EMBED, hidden=HIDDEN)
    src_tokens = jax.random.randint(k_src, (B, S_SRC), 0, VOCAB, dtype=jnp.int32)
    tgt_inputs = jax.random.randint(k_tgt, (B, T_TGT), 0, VOCAB, dtype=jnp.int32)
    src_lengths = jnp.full((B,), S_SRC, dtype=jnp.int32)

    logits = seq2seq_model_forward(params, src_tokens, src_lengths, tgt_inputs)
    logits = jax.block_until_ready(logits)

    assert logits.shape == (B, T_TGT, VOCAB), logits.shape
    assert bool(jnp.all(jnp.isfinite(logits)))
    print("KERNEL_OK")
</pallas_src>

<mosaic_0001>
module attributes {stable_mosaic.version = 11 : i64} {
  func.func @_embed_linear_tanh_kernel(%arg0: i32, %arg1: memref<16x1xi32, #tpu.memory_space<vmem>>, %arg2: memref<256x128xbf16, #tpu.memory_space<vmem>>, %arg3: memref<128x128xbf16, #tpu.memory_space<vmem>>, %arg4: memref<1x128xf32, #tpu.memory_space<vmem>>, %arg5: memref<16x128xbf16, #tpu.memory_space<vmem>>) attributes {dimension_semantics = [#tpu.dimension_semantics<parallel>], iteration_bounds = array<i64: 1>, scalar_prefetch = 0 : i64, scratch_operands = 0 : i64, tpu.core_type = #tpu.core_type<tc>, window_params = [{transform_indices = @transform_0, window_bounds = array<i64: 16, 1>}, {pipeline_mode = #tpu.pipeline_mode<synchronous>, transform_indices = @transform_1, window_bounds = array<i64: 256, 128>}, {pipeline_mode = #tpu.pipeline_mode<synchronous>, transform_indices = @transform_2, window_bounds = array<i64: 128, 128>}, {pipeline_mode = #tpu.pipeline_mode<synchronous>, transform_indices = @transform_3, window_bounds = array<i64: 1, 128>}, {transform_indices = @transform_4, window_bounds = array<i64: 16, 128>}]} {
    %c0 = arith.constant 0 : index
    %c0_0 = arith.constant 0 : index
    %0 = vector.load %arg1[%c0, %c0_0] : memref<16x1xi32, #tpu.memory_space<vmem>>, vector<16x1xi32>
    %1 = tpu.iota {dimensions = array<i32: 1>} : vector<16x256xi32>
    %2 = vector.broadcast %0 : vector<16x1xi32> to vector<16x256xi32>
    %3 = arith.cmpi eq, %1, %2 : vector<16x256xi32>
    %cst = arith.constant 1.000000e+00 : f32
    %cst_1 = arith.constant 0.000000e+00 : f32
    %4 = vector.broadcast %cst : f32 to vector<16x256xf32>
    %5 = vector.broadcast %cst_1 : f32 to vector<16x256xf32>
    %6 = arith.select %3, %4, %5 : vector<16x256xi1>, vector<16x256xf32>
    %7 = arith.truncf %6 : vector<16x256xf32> to vector<16x256xbf16>
    %c0_2 = arith.constant 0 : index
    %c0_3 = arith.constant 0 : index
    %8 = vector.load %arg2[%c0_2, %c0_3] : memref<256x128xbf16, #tpu.memory_space<vmem>>, vector<256x128xbf16>
    %cst_4 = arith.constant dense<0.000000e+00> : vector<16x128xf32>
    %9 = tpu.matmul %7, %8, %cst_4 {dimension_numbers = #tpu.dot_dimension_numbers<[1], [0], [0], [1], [0, 0, 1, 1], [], []>} : vector<16x256xbf16>, vector<256x128xbf16>, vector<16x128xf32> -> vector<16x128xf32>
    %10 = arith.truncf %9 : vector<16x128xf32> to vector<16x128xbf16>
    %c0_5 = arith.constant 0 : index
    %c0_6 = arith.constant 0 : index
    %11 = vector.load %arg3[%c0_5, %c0_6] : memref<128x128xbf16, #tpu.memory_space<vmem>>, vector<128x128xbf16>
    %cst_7 = arith.constant dense<0.000000e+00> : vector<16x128xf32>
    %12 = tpu.matmul %10, %11, %cst_7 {dimension_numbers = #tpu.dot_dimension_numbers<[1], [0], [0], [1], [0, 0, 1, 1], [], []>} : vector<16x128xbf16>, vector<128x128xbf16>, vector<16x128xf32> -> vector<16x128xf32>
    %c0_8 = arith.constant 0 : index
    %c0_9 = arith.constant 0 : index
    %13 = vector.load %arg4[%c0_8, %c0_9] : memref<1x128xf32, #tpu.memory_space<vmem>>, vector<1x128xf32>
    %14 = vector.broadcast %13 : vector<1x128xf32> to vector<16x128xf32>
    %15 = arith.addf %12, %14 : vector<16x128xf32>
    %16 = math.tanh %15 : vector<16x128xf32>
    %17 = arith.truncf %16 : vector<16x128xf32> to vector<16x128xbf16>
    %c0_10 = arith.constant 0 : index
    %c0_11 = arith.constant 0 : index
    %18 = vector.load %arg5[%c0_10, %c0_11] : memref<16x128xbf16, #tpu.memory_space<vmem>>, vector<16x128xbf16>
    tpu.vector_store %arg5[%c0_10, %c0_11], %17 {strides = array<i32>} : memref<16x128xbf16, #tpu.memory_space<vmem>>, vector<16x128xbf16>,
    return
  }
  func.func @transform_0(%arg0: i32) -> (i32, i32) {
    %c0_i32 = arith.constant 0 : i32
    %c0_i32_0 = arith.constant 0 : i32
    return %arg0, %c0_i32 : i32, i32
  }
  func.func @transform_1(%arg0: i32) -> (i32, i32) {
    %c0_i32 = arith.constant 0 : i32
    %c0_i32_0 = arith.constant 0 : i32
    %c0_i32_1 = arith.constant 0 : i32
    return %c0_i32, %c0_i32_0 : i32, i32
  }
  func.func @transform_2(%arg0: i32) -> (i32, i32) {
    %c0_i32 = arith.constant 0 : i32
    %c0_i32_0 = arith.constant 0 : i32
    %c0_i32_1 = arith.constant 0 : i32
    return %c0_i32, %c0_i32_0 : i32, i32
  }
  func.func @transform_3(%arg0: i32) -> (i32, i32) {
    %c0_i32 = arith.constant 0 : i32
    %c0_i32_0 = arith.constant 0 : i32
    %c0_i32_1 = arith.constant 0 : i32
    return %c0_i32, %c0_i32_0 : i32, i32
  }
  func.func @transform_4(%arg0: i32) -> (i32, i32) {
    %c0_i32 = arith.constant 0 : i32
    %c0_i32_0 = arith.constant 0 : i32
    return %arg0, %c0_i32 : i32, i32
  }
}

module attributes {stable_mosaic.version = 11 : i64} {
  func.func @_attn_ctx_kernel(%arg0: i32, %arg1: memref<2xi32, #tpu.memory_space<smem>>, %arg2: memref<1x8x128xbf16, #tpu.memory_space<vmem>>, %arg3: memref<1x8x128xbf16, #tpu.memory_space<vmem>>, %arg4: memref<1x8x128xbf16, #tpu.memory_space<vmem>>) attributes {dimension_semantics = [#tpu.dimension_semantics<parallel>], iteration_bounds = array<i64: 2>, scalar_prefetch = 1 : i64, scratch_operands = 0 : i64, tpu.core_type = #tpu.core_type<tc>, window_params = [{transform_indices = @transform_0, window_bounds = array<i64: 1, 8, 128>}, {transform_indices = @transform_1, window_bounds = array<i64: 1, 8, 128>}, {transform_indices = @transform_2, window_bounds = array<i64: 1, 8, 128>}]} {
    %c0 = arith.constant 0 : index
    %c0_0 = arith.constant 0 : index
    %c0_1 = arith.constant 0 : index
    %0 = vector.load %arg2[%c0, %c0_0, %c0_1] : memref<1x8x128xbf16, #tpu.memory_space<vmem>>, vector<1x8x128xbf16>
    %1 = vector.shape_cast %0 : vector<1x8x128xbf16> to vector<8x128xbf16>
    %c0_2 = arith.constant 0 : index
    %c0_3 = arith.constant 0 : index
    %c0_4 = arith.constant 0 : index
    %2 = vector.load %arg3[%c0_2, %c0_3, %c0_4] : memref<1x8x128xbf16, #tpu.memory_space<vmem>>, vector<1x8x128xbf16>
    %3 = vector.shape_cast %2 : vector<1x8x128xbf16> to vector<8x128xbf16>
    %4 = arith.extf %1 : vector<8x128xbf16> to vector<8x128xf32>
    %cst = arith.constant 0.0883883461 : f32
    %5 = vector.broadcast %cst : f32 to vector<8x128xf32>
    %6 = arith.mulf %4, %5 : vector<8x128xf32>
    %7 = arith.truncf %6 : vector<8x128xf32> to vector<8x128xbf16>
    %cst_5 = arith.constant dense<0.000000e+00> : vector<8x8xf32>
    %8 = tpu.matmul %7, %3, %cst_5 {dimension_numbers = #tpu.dot_dimension_numbers<[1], [1], [0], [0], [0, 0, 1, 0], [], []>} : vector<8x128xbf16>, vector<8x128xbf16>, vector<8x8xf32> -> vector<8x8xf32>
    %9 = arith.index_cast %arg0 : i32 to index
    %10 = memref.load %arg1[%9] : memref<2xi32, #tpu.memory_space<smem>>
    %11 = tpu.iota {dimensions = array<i32: 1>} : vector<8x8xi32>
    %12 = vector.broadcast %10 : i32 to vector<8x8xi32>
    %13 = arith.cmpi slt, %11, %12 : vector<8x8xi32>
    %cst_6 = arith.constant -1.000000e+30 : f32
    %14 = vector.broadcast %cst_6 : f32 to vector<8x8xf32>
    %15 = arith.select %13, %8, %14 : vector<8x8xi1>, vector<8x8xf32>
    %cst_7 = arith.constant dense<0xFF800000> : vector<8xf32>
    %16 = vector.multi_reduction <maximumf>, %15, %cst_7 [1] : vector<8x8xf32> to vector<8xf32>
    %17 = vector.shape_cast %16 : vector<8xf32> to vector<8x1xf32>
    %18 = vector.broadcast %17 : vector<8x1xf32> to vector<8x8xf32>
    %19 = arith.subf %15, %18 : vector<8x8xf32>
    %20 = math.exp %19 : vector<8x8xf32>
    %cst_8 = arith.constant dense<0.000000e+00> : vector<8xf32>
    %21 = vector.multi_reduction <add>, %20, %cst_8 [1] : vector<8x8xf32> to vector<8xf32>
    %22 = vector.shape_cast %21 : vector<8xf32> to vector<8x1xf32>
    %23 = tpu.reciprocal %22 {approx = true} : vector<8x1xf32> -> vector<8x1xf32>
    %24 = vector.broadcast %23 : vector<8x1xf32> to vector<8x8xf32>
    %25 = arith.mulf %20, %24 : vector<8x8xf32>
    %26 = arith.truncf %25 : vector<8x8xf32> to vector<8x8xbf16>
    %cst_9 = arith.constant dense<0.000000e+00> : vector<8x128xf32>
    %27 = tpu.matmul %26, %3, %cst_9 {dimension_numbers = #tpu.dot_dimension_numbers<[1], [0], [0], [1], [0, 0, 1, 1], [], []>} : vector<8x8xbf16>, vector<8x128xbf16>, vector<8x128xf32> -> vector<8x128xf32>
    %28 = arith.extf %1 : vector<8x128xbf16> to vector<8x128xf32>
    %29 = arith.addf %28, %27 : vector<8x128xf32>
    %30 = arith.truncf %29 : vector<8x128xf32> to vector<8x128xbf16>
    %c0_10 = arith.constant 0 : index
    %c0_11 = arith.constant 0 : index
    %c0_12 = arith.constant 0 : index
    %31 = vector.load %arg4[%c0_10, %c0_11, %c0_12] : memref<1x8x128xbf16, #tpu.memory_space<vmem>>, vector<1x8x128xbf16>
    %32 = vector.shape_cast %31 : vector<1x8x128xbf16> to vector<8x128xbf16>
    %33 = vector.shape_cast %30 : vector<8x128xbf16> to vector<1x8x128xbf16>
    tpu.vector_store %arg4[%c0_10, %c0_11, %c0_12], %33 {strides = array<i32>} : memref<1x8x128xbf16, #tpu.memory_space<vmem>>, vector<1x8x128xbf16>,
    return
  }
  func.func @transform_0(%arg0: i32, %arg1: memref<2xi32, #tpu.memory_space<smem>>) -> (i32, i32, i32) {
    %c0_i32 = arith.constant 0 : i32
    %c0_i32_0 = arith.constant 0 : i32
    %c0_i32_1 = arith.constant 0 : i32
    return %arg0, %c0_i32, %c0_i32_0 : i32, i32, i32
  }
  func.func @transform_1(%arg0: i32, %arg1: memref<2xi32, #tpu.memory_space<smem>>) -> (i32, i32, i32) {
    %c0_i32 = arith.constant 0 : i32
    %c0_i32_0 = arith.constant 0 : i32
    %c0_i32_1 = arith.constant 0 : i32
    return %arg0, %c0_i32, %c0_i32_0 : i32, i32, i32
  }
  func.func @transform_2(%arg0: i32, %arg1: memref<2xi32, #tpu.memory_space<smem>>) -> (i32, i32, i32) {
    %c0_i32 = arith.constant 0 : i32
    %c0_i32_0 = arith.constant 0 : i32
    %c0_i32_1 = arith.constant 0 : i32
    return %arg0, %c0_i32, %c0_i32_0 : i32, i32, i32
  }
}

module attributes {stable_mosaic.version = 11 : i64} {
  func.func @_embed_linear_tanh_kernel(%arg0: i32, %arg1: memref<16x1xi32, #tpu.memory_space<vmem>>, %arg2: memref<256x128xbf16, #tpu.memory_space<vmem>>, %arg3: memref<128x128xbf16, #tpu.memory_space<vmem>>, %arg4: memref<1x128xf32, #tpu.memory_space<vmem>>, %arg5: memref<16x128xbf16, #tpu.memory_space<vmem>>) attributes {dimension_semantics = [#tpu.dimension_semantics<parallel>], iteration_bounds = array<i64: 1>, scalar_prefetch = 0 : i64, scratch_operands = 0 : i64, tpu.core_type = #tpu.core_type<tc>, window_params = [{transform_indices = @transform_0, window_bounds = array<i64: 16, 1>}, {pipeline_mode = #tpu.pipeline_mode<synchronous>, transform_indices = @transform_1, window_bounds = array<i64: 256, 128>}, {pipeline_mode = #tpu.pipeline_mode<synchronous>, transform_indices = @transform_2, window_bounds = array<i64: 128, 128>}, {pipeline_mode = #tpu.pipeline_mode<synchronous>, transform_indices = @transform_3, window_bounds = array<i64: 1, 128>}, {transform_indices = @transform_4, window_bounds = array<i64: 16, 128>}]} {
    %c0 = arith.constant 0 : index
    %c0_0 = arith.constant 0 : index
    %0 = vector.load %arg1[%c0, %c0_0] : memref<16x1xi32, #tpu.memory_space<vmem>>, vector<16x1xi32>
    %1 = tpu.iota {dimensions = array<i32: 1>} : vector<16x256xi32>
    %2 = vector.broadcast %0 : vector<16x1xi32> to vector<16x256xi32>
    %3 = arith.cmpi eq, %1, %2 : vector<16x256xi32>
    %cst = arith.constant 1.000000e+00 : f32
    %cst_1 = arith.constant 0.000000e+00 : f32
    %4 = vector.broadcast %cst : f32 to vector<16x256xf32>
    %5 = vector.broadcast %cst_1 : f32 to vector<16x256xf32>
    %6 = arith.select %3, %4, %5 : vector<16x256xi1>, vector<16x256xf32>
    %7 = arith.truncf %6 : vector<16x256xf32> to vector<16x256xbf16>
    %c0_2 = arith.constant 0 : index
    %c0_3 = arith.constant 0 : index
    %8 = vector.load %arg2[%c0_2, %c0_3] : memref<256x128xbf16, #tpu.memory_space<vmem>>, vector<256x128xbf16>
    %cst_4 = arith.constant dense<0.000000e+00> : vector<16x128xf32>
    %9 = tpu.matmul %7, %8, %cst_4 {dimension_numbers = #tpu.dot_dimension_numbers<[1], [0], [0], [1], [0, 0, 1, 1], [], []>} : vector<16x256xbf16>, vector<256x128xbf16>, vector<16x128xf32> -> vector<16x128xf32>
    %10 = arith.truncf %9 : vector<16x128xf32> to vector<16x128xbf16>
    %c0_5 = arith.constant 0 : index
    %c0_6 = arith.constant 0 : index
    %11 = vector.load %arg3[%c0_5, %c0_6] : memref<128x128xbf16, #tpu.memory_space<vmem>>, vector<128x128xbf16>
    %cst_7 = arith.constant dense<0.000000e+00> : vector<16x128xf32>
    %12 = tpu.matmul %10, %11, %cst_7 {dimension_numbers = #tpu.dot_dimension_numbers<[1], [0], [0], [1], [0, 0, 1, 1], [], []>} : vector<16x128xbf16>, vector<128x128xbf16>, vector<16x128xf32> -> vector<16x128xf32>
    %c0_8 = arith.constant 0 : index
    %c0_9 = arith.constant 0 : index
    %13 = vector.load %arg4[%c0_8, %c0_9] : memref<1x128xf32, #tpu.memory_space<vmem>>, vector<1x128xf32>
    %14 = vector.broadcast %13 : vector<1x128xf32> to vector<16x128xf32>
    %15 = arith.addf %12, %14 : vector<16x128xf32>
    %16 = math.tanh %15 : vector<16x128xf32>
    %17 = arith.truncf %16 : vector<16x128xf32> to vector<16x128xbf16>
    %c0_10 = arith.constant 0 : index
    %c0_11 = arith.constant 0 : index
    %18 = vector.load %arg5[%c0_10, %c0_11] : memref<16x128xbf16, #tpu.memory_space<vmem>>, vector<16x128xbf16>
    tpu.vector_store %arg5[%c0_10, %c0_11], %17 {strides = array<i32>} : memref<16x128xbf16, #tpu.memory_space<vmem>>, vector<16x128xbf16>,
    return
  }
  func.func @transform_0(%arg0: i32) -> (i32, i32) {
    %c0_i32 = arith.constant 0 : i32
    %c0_i32_0 = arith.constant 0 : i32
    return %arg0, %c0_i32 : i32, i32
  }
  func.func @transform_1(%arg0: i32) -> (i32, i32) {
    %c0_i32 = arith.constant 0 : i32
    %c0_i32_0 = arith.constant 0 : i32
    %c0_i32_1 = arith.constant 0 : i32
    return %c0_i32, %c0_i32_0 : i32, i32
  }
  func.func @transform_2(%arg0: i32) -> (i32, i32) {
    %c0_i32 = arith.constant 0 : i32
    %c0_i32_0 = arith.constant 0 : i32
    %c0_i32_1 = arith.constant 0 : i32
    return %c0_i32, %c0_i32_0 : i32, i32
  }
  func.func @transform_3(%arg0: i32) -> (i32, i32) {
    %c0_i32 = arith.constant 0 : i32
    %c0_i32_0 = arith.constant 0 : i32
    %c0_i32_1 = arith.constant 0 : i32
    return %c0_i32, %c0_i32_0 : i32, i32
  }
  func.func @transform_4(%arg0: i32) -> (i32, i32) {
    %c0_i32 = arith.constant 0 : i32
    %c0_i32_0 = arith.constant 0 : i32
    return %arg0, %c0_i32 : i32, i32
  }
}

module attributes {stable_mosaic.version = 11 : i64} {
  func.func @_combine_project_kernel(%arg0: i32, %arg1: memref<16x128xbf16, #tpu.memory_space<vmem>>, %arg2: memref<128x128xbf16, #tpu.memory_space<vmem>>, %arg3: memref<128x256xbf16, #tpu.memory_space<vmem>>, %arg4: memref<16x256xf32, #tpu.memory_space<vmem>>) attributes {dimension_semantics = [#tpu.dimension_semantics<parallel>], iteration_bounds = array<i64: 1>, scalar_prefetch = 0 : i64, scratch_operands = 0 : i64, tpu.core_type = #tpu.core_type<tc>, window_params = [{transform_indices = @transform_0, window_bounds = array<i64: 16, 128>}, {pipeline_mode = #tpu.pipeline_mode<synchronous>, transform_indices = @transform_1, window_bounds = array<i64: 128, 128>}, {pipeline_mode = #tpu.pipeline_mode<synchronous>, transform_indices = @transform_2, window_bounds = array<i64: 128, 256>}, {transform_indices = @transform_3, window_bounds = array<i64: 16, 256>}]} {
    %c0 = arith.constant 0 : index
    %c0_0 = arith.constant 0 : index
    %0 = vector.load %arg1[%c0, %c0_0] : memref<16x128xbf16, #tpu.memory_space<vmem>>, vector<16x128xbf16>
    %c0_1 = arith.constant 0 : index
    %c0_2 = arith.constant 0 : index
    %1 = vector.load %arg2[%c0_1, %c0_2] : memref<128x128xbf16, #tpu.memory_space<vmem>>, vector<128x128xbf16>
    %cst = arith.constant dense<0.000000e+00> : vector<16x128xf32>
    %2 = tpu.matmul %0, %1, %cst {dimension_numbers = #tpu.dot_dimension_numbers<[1], [0], [0], [1], [0, 0, 1, 1], [], []>} : vector<16x128xbf16>, vector<128x128xbf16>, vector<16x128xf32> -> vector<16x128xf32>
    %3 = math.tanh %2 : vector<16x128xf32>
    %4 = arith.truncf %3 : vector<16x128xf32> to vector<16x128xbf16>
    %c0_3 = arith.constant 0 : index
    %c0_4 = arith.constant 0 : index
    %5 = vector.load %arg3[%c0_3, %c0_4] : memref<128x256xbf16, #tpu.memory_space<vmem>>, vector<128x256xbf16>
    %cst_5 = arith.constant dense<0.000000e+00> : vector<16x256xf32>
    %6 = tpu.matmul %4, %5, %cst_5 {dimension_numbers = #tpu.dot_dimension_numbers<[1], [0], [0], [1], [0, 0, 1, 1], [], []>} : vector<16x128xbf16>, vector<128x256xbf16>, vector<16x256xf32> -> vector<16x256xf32>
    %c0_6 = arith.constant 0 : index
    %c0_7 = arith.constant 0 : index
    %7 = vector.load %arg4[%c0_6, %c0_7] : memref<16x256xf32, #tpu.memory_space<vmem>>, vector<16x256xf32>
    tpu.vector_store %arg4[%c0_6, %c0_7], %6 {strides = array<i32>} : memref<16x256xf32, #tpu.memory_space<vmem>>, vector<16x256xf32>,
    return
  }
  func.func @transform_0(%arg0: i32) -> (i32, i32) {
    %c0_i32 = arith.constant 0 : i32
    %c0_i32_0 = arith.constant 0 : i32
    return %arg0, %c0_i32 : i32, i32
  }
  func.func @transform_1(%arg0: i32) -> (i32, i32) {
    %c0_i32 = arith.constant 0 : i32
    %c0_i32_0 = arith.constant 0 : i32
    %c0_i32_1 = arith.constant 0 : i32
    return %c0_i32, %c0_i32_0 : i32, i32
  }
  func.func @transform_2(%arg0: i32) -> (i32, i32) {
    %c0_i32 = arith.constant 0 : i32
    %c0_i32_0 = arith.constant 0 : i32
    %c0_i32_1 = arith.constant 0 : i32
    return %c0_i32, %c0_i32_0 : i32, i32
  }
  func.func @transform_3(%arg0: i32) -> (i32, i32) {
    %c0_i32 = arith.constant 0 : i32
    %c0_i32_0 = arith.constant 0 : i32
    return %arg0, %c0_i32 : i32, i32
  }
}

</mosaic_0001>

<llo_original>
// kernel: seq2seq_model_forward.6
$region0: #{seq2seq_model_forward.6}
  #allocation0 [shape = 'u32[]', space=smem, size = 0x4, offset = 0x4, fixed_abs, tag = 'smem constant byte address 0x4 - core index']
  #allocation1 [shape = 'u32[144,128]{1,0:T(1,128)}', space=vmem, size = 0x12000, scoped, tag = 'internal scratch']
  #allocation2 [shape = 's32[1]{0}', space=sflag, size = 0x4, scoped, tag = 'scoped memory for seq2seq_model_forward.6']
  #allocation3 [shape = 'u8[512]{0}', space=smem, size = 0x200, scoped, tag = 'prefetched SMEM operand 0']
  %s0 = inlined_call_operand.vmem [shape: s32[2], index: 0, kind: input, shape index: {}]
  %s1 = inlined_call_operand.vmem [shape: bf16[2,8,128], index: 1, kind: input, shape index: {}]
  %s2 = inlined_call_operand.vmem [shape: bf16[2,8,128], index: 2, kind: input, shape index: {}]
  %s3 = inlined_call_operand.vmem [shape: bf16[2,8,128], index: 3, kind: output, shape index: {}]
  %s4 = sld [smem:[#allocation0]]
  $region41: #{seq2seq_model_forward.6} parent=0
    _
  %s6 = ssub.s32 1, %s4
  %s7 = scalar_select 0, %s6, %s4
  %s8 = sshll.u32 %s0, 4
  %s9 = int_to_ptr.vmem [resolvable:$true] %s8
  %11 = dma.vmem_to_smem %s9, 16, [#allocation3], [#allocation2]
  %12 = dma.done [#allocation2], 16
  %13 = sfence
  loop: start=0, step=1, limit=4
  $region2: #{seq2seq_model_forward.6} parent=0 // loop_pre_header
    _
  $region3: #{seq2seq_model_forward.6} parent=0 // loop_header
    %s15 = sphi 0, %s19
    %p16 = scmp.ge.s32.totalorder %s15, 4
    %s25 = sphi 0, %s27
    %s28 = sphi 0, %s25
    %s29 = sphi 0, %s28
    %s45 = sphi 0, %s29
    %s51 = sphi 0, %s53
    %s54 = sphi 0, %s51
    %s55 = sphi 0, %s54
    %s71 = sphi 0, %s55
    %s77 = sphi 0, %s79
    %s80 = sphi 0, %s77
    %s81 = sphi 0, %s80
    %s97 = sphi 0, %s81
  $region4: #{seq2seq_model_forward.6} parent=0 // loop_header_branch
    %18 = sbr.rel (%p16) target = $region8
  $region5: #{seq2seq_model_forward.6} parent=0 // loop_body
    %s20 = ssub.s32 %s15, 1
    %s21 = ssub.s32 %s15, 2
    %s22 = sadd.s32 %s15, 1
    %s23 = ssub.s32 %s15, %s22
    %p24 = scmp.eq.s32.totalorder %s23, 0
    %s26 = sadd.s32 %s25, 1
    %s27 = scalar_select %p24, %s25, %s26
    %p30 = pneg %p24
    %p31 = scmp.eq.s32.totalorder %s15, 1
    %p32 = por %p30, %p31
    %p33 = scmp.ne.s32.totalorder %s25, %s28
    %p34 = scmp.eq.s32.totalorder %s15, 0
    %p35 = por %p33, %p34
    %p36 = scmp.ne.s32.totalorder %s25, %s28
    %p37 = scmp.eq.s32.totalorder %s20, 1
    %p38 = por %p36, %p37
    %p39 = scmp.ne.s32.totalorder %s28, %s29
    %p40 = scmp.eq.s32.totalorder %s20, 0
    %p41 = por %p39, %p40
    %p42 = scmp.ne.s32.totalorder %s28, %s29
    %p43 = scmp.eq.s32.totalorder %s21, 1
    %p44 = por %p42, %p43
    %p46 = scmp.ne.s32.totalorder %s29, %s45
    %p47 = scmp.eq.s32.totalorder %s21, 0
    %p48 = por %p46, %p47
    %s49 = ssub.s32 %s15, %s22
    %p50 = scmp.eq.s32.totalorder %s49, 0
    %s52 = sadd.s32 %s51, 1
    %s53 = scalar_select %p50, %s51, %s52
    %p56 = pneg %p50
    %p57 = scmp.eq.s32.totalorder %s15, 1
    %p58 = por %p56, %p57
    %p59 = scmp.ne.s32.totalorder %s51, %s54
    %p60 = scmp.eq.s32.totalorder %s15, 0
    %p61 = por %p59, %p60
    %p62 = scmp.ne.s32.totalorder %s51, %s54
    %p63 = scmp.eq.s32.totalorder %s20, 1
    %p64 = por %p62, %p63
    %p65 = scmp.ne.s32.totalorder %s54, %s55
    %p66 = scmp.eq.s32.totalorder %s20, 0
    %p67 = por %p65, %p66
    %p68 = scmp.ne.s32.totalorder %s54, %s55
    %p69 = scmp.eq.s32.totalorder %s21, 1
    %p70 = por %p68, %p69
    %p72 = scmp.ne.s32.totalorder %s55, %s71
    %p73 = scmp.eq.s32.totalorder %s21, 0
    %p74 = por %p72, %p73
    %s75 = ssub.s32 %s15, %s22
    %p76 = scmp.eq.s32.totalorder %s75, 0
    %s78 = sadd.s32 %s77, 1
    %s79 = scalar_select %p76, %s77, %s78
    %p82 = pneg %p76
    %p83 = scmp.eq.s32.totalorder %s15, 1
    %p84 = por %p82, %p83
    %p85 = scmp.ne.s32.totalorder %s77, %s80
    %p86 = scmp.eq.s32.totalorder %s15, 0
    %p87 = por %p85, %p86
    %p88 = scmp.ne.s32.totalorder %s77, %s80
    %p89 = scmp.eq.s32.totalorder %s20, 1
    %p90 = por %p88, %p89
    %p91 = scmp.ne.s32.totalorder %s80, %s81
    %p92 = scmp.eq.s32.totalorder %s20, 0
    %p93 = por %p91, %p92
    %p94 = scmp.ne.s32.totalorder %s80, %s81
    %p95 = scmp.eq.s32.totalorder %s21, 1
    %p96 = por %p94, %p95
    %p98 = scmp.ne.s32.totalorder %s81, %s97
    %p99 = scmp.eq.s32.totalorder %s21, 0
    %p100 = por %p98, %p99
    %p101 = scmp.le.s32.totalorder 1, %s15
    %p102 = scmp.lt.s32.totalorder %s15, 3
    %p103 = pnand %p101, %p102
    %p104 = pneg %p103
    // Predicated region
    $region9: #{seq2seq_model_forward.6} parent=5 // pred_check
      _
    $region10: #{seq2seq_model_forward.6} parent=5 // pred_check_branch
      %106 = sbr.rel (%p103) target = $region12
    $region11: #{seq2seq_model_forward.6} parent=5 // pred_region
      %s107 = ssub.s32 %s15, 1
    $region12: #{seq2seq_model_forward.6} parent=5 // pred_fallthru
      _
    %p108 = scmp.lt.s32.totalorder %s15, 2
    // Predicated region
    $region13: #{seq2seq_model_forward.6} parent=5 // pred_check
      %p109 = pneg %p108
    $region14: #{seq2seq_model_forward.6} parent=5 // pred_check_branch
      %111 = sbr.rel (%p109) target = $region16
    $region15: #{seq2seq_model_forward.6} parent=5 // pred_region
      // Predicated region
      $region17: #{seq2seq_model_forward.6} parent=15 // pred_check
        %p112 = pneg %p35
      $region18: #{seq2seq_model_forward.6} parent=15 // pred_check_branch
        %114 = sbr.rel (%p112) target = $region20
      $region19: #{seq2seq_model_forward.6} parent=15 // pred_region
        %p115 = scmp.lt.s32.totalorder %s15, 1
        %s116 = scalar_select %p115, %s15, 1
        %s117 = smul.addr %s116, 4
        %s118 = scalar_lea.vmem %s1, %s117
      $region20: #{seq2seq_model_forward.6} parent=15 // pred_fallthru
        _
      // Predicated region
      $region21: #{seq2seq_model_forward.6} parent=15 // pred_check
        %p119 = pneg %p61
      $region22: #{seq2seq_model_forward.6} parent=15 // pred_check_branch
        %121 = sbr.rel (%p119) target = $region24
      $region23: #{seq2seq_model_forward.6} parent=15 // pred_region
        %p122 = scmp.lt.s32.totalorder %s15, 1
        %s123 = scalar_select %p122, %s15, 1
        %s124 = smul.addr %s123, 4
        %s125 = scalar_lea.vmem %s2, %s124
      $region24: #{seq2seq_model_forward.6} parent=15 // pred_fallthru
        _
    $region16: #{seq2seq_model_forward.6} parent=5 // pred_fallthru
      _
    %p126 = scmp.le.s32.totalorder 1, %s15
    %p127 = scmp.lt.s32.totalorder %s15, 3
    %p128 = pnand %p126, %p127
    %p129 = pneg %p128
    // Predicated region
    $region25: #{seq2seq_model_forward.6} parent=5 // pred_check
      _
    $region26: #{seq2seq_model_forward.6} parent=5 // pred_check_branch
      %131 = sbr.rel (%p128) target = $region28
    $region27: #{seq2seq_model_forward.6} parent=5 // pred_region
      %s132 = ssub.s32 %s15, 1
      %p133 = scmp.lt.s32.totalorder %s20, 1
      %s134 = scalar_select %p133, %s20, 1
      %s135 = smul.addr %s134, 4
      %s136 = scalar_lea.vmem %s1, %s135
      %p137 = pneg %p41
      %p138 = pneg %p38
      %p139 = scmp.lt.s32.totalorder %s20, 1
      %s140 = scalar_select %p139, %s20, 1
      %s141 = smul.addr %s140, 4
      %s142 = scalar_lea.vmem %s2, %s141
      %p143 = pneg %p67
      %p144 = pneg %p64
      %p145 = pneg %p93
      %p146 = pneg %p90
      %p147 = scmp.lt.s32.totalorder %s20, 1
      %s148 = scalar_select %p147, %s20, 1
      %s149 = smul.addr %s148, 4
      %s150 = scalar_lea.vmem %s3, %s149
      %p151 = scmp.lt.s32.totalorder %s20, 1
      %s152 = scalar_select %p151, %s20, 1
      %s153 = smul.addr %s152, 4
      %s154 = scalar_lea.vmem %s1, %s153
      %p155 = scmp.lt.s32.totalorder %s20, 1
      %s156 = scalar_select %p155, %s20, 1
      %s157 = smul.addr %s156, 4
      %s158 = scalar_lea.vmem %s2, %s157
      %p159 = scmp.lt.s32.totalorder %s20, 1
      %s160 = scalar_select %p159, %s20, 1
      %s161 = smul.addr %s160, 4
      %s162 = scalar_lea.vmem %s3, %s161
      %v164 = vld [vmem:[%s154] sm:$0xf]
      %v165 = vld [vmem:[%s158] sm:$0xf]
      %v166 = vunpack.c.l.bf16 %v164
      %v167 = vmul.f32 %v166, 0.088388346
      %v168 = vpack.c.bf16 %v167, %v167
      %169 = vmatprep.subr.bf16.mxu0 0
      %170 = vmatpush1.bf16.xpose.msra.mxu0 %v165
      %171 = vmatprep.subr.bf16.mxu0 0
      %172 = vmatpush1.bf16.xpose.msra.mxu0 0
      %173 = vmatprep.subr.bf16.mxu0 0
      %174 = vmatpush1.bf16.xpose.msra.mxu0 0
      %175 = vmatprep.subr.bf16.mxu0 0
      %176 = vmatpush1.bf16.xpose.msra.mxu0 0
      %177 = vmatprep.subr.bf16.mxu0 0
      %178 = vmatpush1.bf16.xpose.msra.mxu0 0
      %179 = vmatprep.subr.bf16.mxu0 0
      %180 = vmatpush1.bf16.xpose.msra.mxu0 0
      %181 = vmatprep.subr.bf16.mxu0 0
      %182 = vmatpush1.bf16.xpose.msra.mxu0 0
      %183 = vmatprep.subr.bf16.mxu0 0
      %184 = vmatpush1.bf16.xpose.msra.mxu0 0
      %185 = vmatprep.subr.bf16.mxu0 0
      %186 = vmatpush1.bf16.xpose.msra.mxu0 0
      %187 = vmatprep.subr.bf16.mxu0 0
      %188 = vmatpush1.bf16.xpose.msra.mxu0 0
      %189 = vmatprep.subr.bf16.mxu0 0
      %190 = vmatpush1.bf16.xpose.msra.mxu0 0
      %191 = vmatprep.subr.bf16.mxu0 0
      %192 = vmatpush1.bf16.xpose.msra.mxu0 0
      %193 = vmatprep.subr.bf16.mxu0 0
      %194 = vmatpush1.bf16.xpose.msra.mxu0 0
      %195 = vmatprep.subr.bf16.mxu0 0
      %196 = vmatpush1.bf16.xpose.msra.mxu0 0
      %197 = vmatprep.subr.bf16.mxu0 0
      %198 = vmatpush1.bf16.xpose.msra.mxu0 0
      %199 = vmatprep.subr.bf16.mxu0 0
      %200 = vmatpush1.bf16.xpose.msra.mxu0 0
      %201 = vmatprep.mubr.bf16.mxu0 0
      %202 = vmatmul.mubr.bf16.gmra.mrb[0].mxu0 %v168
      %v203 = vpop.f32.mrb[0].mxu0
      %v204 = vadd.f32 0.0, %v203
      %v205 = vpop.f32.mrb[0].mxu0
      %v206 = vpop.f32.mrb[0].mxu0
      %v207 = vpop.f32.mrb[0].mxu0
      %208 = vdwg.mxu0
      %s209 = sld [smem:[#allocation3 + %s20]]
      %v210 = vlaneseq
      %v211 = vand.u32 %v210, 127
      %v212 = vstv %s209
      %vm213 = vcmp.lt.s32.totalorder %v211, %v212
      %v214 = vsel %vm213, %v204, -1e+30
      %vm215 = vcmask 64512
      %v216 = vsel %vm215, %v214, -inf
      %217 = vmax.xlane.f32.xlu0 %v216
      %v218 = vpop.xlane.xlu0 %217
      %v219 = vsub.f32 %v214, %v218
      %v220 = vmul.f32 %v219, 1.442695
      %v221 = vpow.pop %v220
      %v222 = vsel %vm215, %v221, 0.0
      %223 = vadd.xlane.f32.xlu0 %v222
      %v224 = vpop.xlane.xlu0 %223
      %v225 = vrcp.pop %v224
      %v226 = vmul.f32 %v221, %v225
      %v227 = vpack.c.bf16 %v226, %v226
      %v229 = vsel %vm215, %v227, 0
      %vm231 = vcmask 1043456
      %v233 = vsel %vm231, %v165, 0
      %235 = vmatprep.subr.bf16.mxu0 0
      %236 = vmatpush1.bf16.msra.mxu0 %v233
      %237 = vmatprep.subr.bf16.mxu0 0
      %238 = vmatpush1.bf16.msra.mxu0 0
      %239 = vmatprep.subr.bf16.mxu0 0
      %240 = vmatpush1.bf16.msra.mxu0 0
      %241 = vmatprep.subr.bf16.mxu0 0
      %242 = vmatpush1.bf16.msra.mxu0 0
      %243 = vmatprep.subr.bf16.mxu0 0
      %244 = vmatpush1.bf16.msra.mxu0 0
      %245 = vmatprep.subr.bf16.mxu0 0
      %246 = vmatpush1.bf16.msra.mxu0 0
      %247 = vmatprep.subr.bf16.mxu0 0
      %248 = vmatpush1.bf16.msra.mxu0 0
      %249 = vmatprep.subr.bf16.mxu0 0
      %250 = vmatpush1.bf16.msra.mxu0 0
      %251 = vmatprep.subr.bf16.mxu0 0
      %252 = vmatpush1.bf16.msra.mxu0 0
      %253 = vmatprep.subr.bf16.mxu0 0
      %254 = vmatpush1.bf16.msra.mxu0 0
      %255 = vmatprep.subr.bf16.mxu0 0
      %256 = vmatpush1.bf16.msra.mxu0 0
      %257 = vmatprep.subr.bf16.mxu0 0
      %258 = vmatpush1.bf16.msra.mxu0 0
      %259 = vmatprep.subr.bf16.mxu0 0
      %260 = vmatpush1.bf16.msra.mxu0 0
      %261 = vmatprep.subr.bf16.mxu0 0
      %262 = vmatpush1.bf16.msra.mxu0 0
      %263 = vmatprep.subr.bf16.mxu0 0
      %264 = vmatpush1.bf16.msra.mxu0 0
      %265 = vmatprep.subr.bf16.mxu0 0
      %266 = vmatpush1.bf16.msra.mxu0 0
      %267 = vmatprep.mubr.bf16.mxu0 0
      %268 = vmatmul.mubr.bf16.gmra.mrb[0].mxu0 %v229
      %v269 = vpop.f32.mrb[0].mxu0
      %v270 = vadd.f32 0.0, %v269
      %v271 = vpop.f32.mrb[0].mxu0
      %v272 = vpop.f32.mrb[0].mxu0
      %v273 = vpop.f32.mrb[0].mxu0
      %274 = vdwg.mxu0
      %v275 = vadd.f32 %v166, %v270
      %v276 = vpack.c.bf16 %v275, %v275
      %277 = vst [vmem:[%s162] sm:$0xf] %v276
      %p278 = scmp.lt.s32.totalorder %s20, 1
      %s279 = scalar_select %p278, %s20, 1
      %s280 = smul.addr %s279, 4
      %s281 = scalar_lea.vmem %s3, %s280
      // Predicated region
      $region29: #{seq2seq_model_forward.6} parent=27 // pred_check
        %p282 = pneg %p90
      $region30: #{seq2seq_model_forward.6} parent=27 // pred_check_branch
        %284 = sbr.rel (%p282) target = $region32
      $region31: #{seq2seq_model_forward.6} parent=27 // pred_region
        _
      $region32: #{seq2seq_model_forward.6} parent=27 // pred_fallthru
        _
    $region28: #{seq2seq_model_forward.6} parent=5 // pred_fallthru
      _
    %p285 = scmp.le.s32.totalorder 2, %s15
    // Predicated region
    $region33: #{seq2seq_model_forward.6} parent=5 // pred_check
      %p286 = pneg %p285
    $region34: #{seq2seq_model_forward.6} parent=5 // pred_check_branch
      %288 = sbr.rel (%p286) target = $region36
    $region35: #{seq2seq_model_forward.6} parent=5 // pred_region
      %s289 = ssub.s32 %s15, 2
      // Predicated region
      $region37: #{seq2seq_model_forward.6} parent=35 // pred_check
        %p290 = pneg %p96
      $region38: #{seq2seq_model_forward.6} parent=35 // pred_check_branch
        %292 = sbr.rel (%p290) target = $region40
      $region39: #{seq2seq_model_forward.6} parent=35 // pred_region
        %p293 = scmp.lt.s32.totalorder %s21, 1
        %s294 = scalar_select %p293, %s21, 1
        %s295 = smul.addr %s294, 4
        %s296 = scalar_lea.vmem %s3, %s295
      $region40: #{seq2seq_model_forward.6} parent=35 // pred_fallthru
        _
    $region36: #{seq2seq_model_forward.6} parent=5 // pred_fallthru
      _
  $region6: #{seq2seq_model_forward.6} parent=0 // loop_footer
    %s19 = sadd.s32 1, %s15
  $region7: #{seq2seq_model_forward.6} parent=0 // loop_footer_branch
    %14 = sbr.rel target = $region3
  $region8: #{seq2seq_model_forward.6} parent=0 // loop_exit
    _

// kernel: seq2seq_model_forward.5
$region0: #{seq2seq_model_forward.5}
  #allocation0 [shape = 'u32[]', space=smem, size = 0x4, offset = 0x4, fixed_abs, tag = 'smem constant byte address 0x4 - core index']
  #allocation1 [shape = 'u32[144,128]{1,0:T(1,128)}', space=vmem, size = 0x12000, scoped, tag = 'internal scratch']
  %s0 = inlined_call_operand.vmem [shape: s32[16,1], index: 0, kind: input, shape index: {}]
  %s1 = inlined_call_operand.vmem [shape: bf16[256,128], index: 1, kind: input, shape index: {}]
  %s2 = inlined_call_operand.vmem [shape: bf16[128,128], index: 2, kind: input, shape index: {}]
  %s3 = inlined_call_operand.vmem [shape: f32[1,128], index: 3, kind: input, shape index: {}]
  %s4 = inlined_call_operand.vmem [shape: bf16[16,128], index: 4, kind: output, shape index: {}]
  %s5 = sld [smem:[#allocation0]]
  $region26: #{seq2seq_model_forward.5} parent=0
    _
  %s7 = ssub.s32 1, %s5
  %s8 = scalar_select 0, %s7, %s5
  // Predicated region
  $region2: #{seq2seq_model_forward.5} parent=0 // pred_check
    _
  $region3: #{seq2seq_model_forward.5} parent=0 // pred_check_branch
    %10 = sbr.rel (0) target = $region5
  $region4: #{seq2seq_model_forward.5} parent=0 // pred_region
    _
  $region5: #{seq2seq_model_forward.5} parent=0 // pred_fallthru
    _
  // Predicated region
  $region6: #{seq2seq_model_forward.5} parent=0 // pred_check
    _
  $region7: #{seq2seq_model_forward.5} parent=0 // pred_check_branch
    %12 = sbr.rel (0) target = $region9
  $region8: #{seq2seq_model_forward.5} parent=0 // pred_region
    _
  $region9: #{seq2seq_model_forward.5} parent=0 // pred_fallthru
    _
  // Predicated region
  $region10: #{seq2seq_model_forward.5} parent=0 // pred_check
    _
  $region11: #{seq2seq_model_forward.5} parent=0 // pred_check_branch
    %14 = sbr.rel (0) target = $region13
  $region12: #{seq2seq_model_forward.5} parent=0 // pred_region
    _
  $region13: #{seq2seq_model_forward.5} parent=0 // pred_fallthru
    _
  // Predicated region
  $region14: #{seq2seq_model_forward.5} parent=0 // pred_check
    _
  $region15: #{seq2seq_model_forward.5} parent=0 // pred_check_branch
    %16 = sbr.rel (0) target = $region17
  $region16: #{seq2seq_model_forward.5} parent=0 // pred_region
    _
  $region17: #{seq2seq_model_forward.5} parent=0 // pred_fallthru
    _
  %v18 = vld [vmem:[%s0] sm:$0xff]
  %v19 = vld [vmem:[%s0 + $0x8] sm:$0xff]
  %v20 = vlaneseq
  %v21 = vand.u32 %v20, 127
  %v22 = vadd.s32 %v21, 128
  %23 = vset.pattern.permute.xlu0 0
  %24 = vperm.xlu0 %23, %v18
  %v25 = vpop.permute.xlu0 %24
  %26 = vset.pattern.permute.xlu0 0
  %27 = vperm.xlu0 %26, %v19
  %v28 = vpop.permute.xlu0 %27
  %vm29 = vcmp.eq.s32.totalorder %v21, %v25
  %vm30 = vcmp.eq.s32.totalorder %v22, %v25
  %vm31 = vcmp.eq.s32.totalorder %v21, %v28
  %vm32 = vcmp.eq.s32.totalorder %v22, %v28
  %v33 = vsel %vm29, 1.0, 0.0
  %v34 = vsel %vm30, 1.0, 0.0
  %v35 = vsel %vm31, 1.0, 0.0
  %v36 = vsel %vm32, 1.0, 0.0
  %v37 = vpack.c.bf16 %v35, %v33
  %v38 = vpack.c.bf16 %v36, %v34
  %v39 = vld [vmem:[%s1] sm:$0xf]
  %v40 = vld [vmem:[%s1 + $0x4] sm:$0xf]
  %v41 = vld [vmem:[%s1 + $0x8] sm:$0xf]
  %v42 = vld [vmem:[%s1 + $0xc] sm:$0xf]
  %v43 = vld [vmem:[%s1 + $0x10] sm:$0xf]
  %v44 = vld [vmem:[%s1 + $0x14] sm:$0xf]
  %v45 = vld [vmem:[%s1 + $0x18] sm:$0xf]
  %v46 = vld [vmem:[%s1 + $0x1c] sm:$0xf]
  %v47 = vld [vmem:[%s1 + $0x20] sm:$0xf]
  %v48 = vld [vmem:[%s1 + $0x24] sm:$0xf]
  %v49 = vld [vmem:[%s1 + $0x28] sm:$0xf]
  %v50 = vld [vmem:[%s1 + $0x2c] sm:$0xf]
  %v51 = vld [vmem:[%s1 + $0x30] sm:$0xf]
  %v52 = vld [vmem:[%s1 + $0x34] sm:$0xf]
  %v53 = vld [vmem:[%s1 + $0x38] sm:$0xf]
  %v54 = vld [vmem:[%s1 + $0x3c] sm:$0xf]
  %v55 = vld [vmem:[%s1 + $0x40] sm:$0xf]
  %v56 = vld [vmem:[%s1 + $0x44] sm:$0xf]
  %v57 = vld [vmem:[%s1 + $0x48] sm:$0xf]
  %v58 = vld [vmem:[%s1 + $0x4c] sm:$0xf]
  %v59 = vld [vmem:[%s1 + $0x50] sm:$0xf]
  %v60 = vld [vmem:[%s1 + $0x54] sm:$0xf]
  %v61 = vld [vmem:[%s1 + $0x58] sm:$0xf]
  %v62 = vld [vmem:[%s1 + $0x5c] sm:$0xf]
  %v63 = vld [vmem:[%s1 + $0x60] sm:$0xf]
  %v64 = vld [vmem:[%s1 + $0x64] sm:$0xf]
  %v65 = vld [vmem:[%s1 + $0x68] sm:$0xf]
  %v66 = vld [vmem:[%s1 + $0x6c] sm:$0xf]
  %v67 = vld [vmem:[%s1 + $0x70] sm:$0xf]
  %v68 = vld [vmem:[%s1 + $0x74] sm:$0xf]
  %v69 = vld [vmem:[%s1 + $0x78] sm:$0xf]
  %v70 = vld [vmem:[%s1 + $0x7c] sm:$0xf]
  %v103 = vunpack.c.l.b16 %v39
  %v104 = vunpack.c.l.b16 %v40
  %v105 = vunpack.c.l.b16 %v41
  %v106 = vunpack.c.l.b16 %v42
  %v107 = vunpack.c.l.b16 %v43
  %v108 = vunpack.c.l.b16 %v44
  %v109 = vunpack.c.l.b16 %v45
  %v110 = vunpack.c.l.b16 %v46
  %v111 = vunpack.c.l.b16 %v47
  %v112 = vunpack.c.l.b16 %v48
  %v113 = vunpack.c.l.b16 %v49
  %v114 = vunpack.c.l.b16 %v50
  %v115 = vunpack.c.l.b16 %v51
  %v116 = vunpack.c.l.b16 %v52
  %v117 = vunpack.c.l.b16 %v53
  %v118 = vunpack.c.l.b16 %v54
  %v119 = vunpack.c.l.b16 %v55
  %v120 = vunpack.c.l.b16 %v56
  %v121 = vunpack.c.l.b16 %v57
  %v122 = vunpack.c.l.b16 %v58
  %v123 = vunpack.c.l.b16 %v59
  %v124 = vunpack.c.l.b16 %v60
  %v125 = vunpack.c.l.b16 %v61
  %v126 = vunpack.c.l.b16 %v62
  %v127 = vunpack.c.l.b16 %v63
  %v128 = vunpack.c.l.b16 %v64
  %v129 = vunpack.c.l.b16 %v65
  %v130 = vunpack.c.l.b16 %v66
  %v131 = vunpack.c.l.b16 %v67
  %v132 = vunpack.c.l.b16 %v68
  %v133 = vunpack.c.l.b16 %v69
  %v134 = vunpack.c.l.b16 %v70
  %v135 = vpack.c.b16 %v104, %v103
  %v136 = vpack.c.b16 %v106, %v105
  %v137 = vpack.c.b16 %v108, %v107
  %v138 = vpack.c.b16 %v110, %v109
  %v139 = vpack.c.b16 %v112, %v111
  %v140 = vpack.c.b16 %v114, %v113
  %v141 = vpack.c.b16 %v116, %v115
  %v142 = vpack.c.b16 %v118, %v117
  %v143 = vpack.c.b16 %v120, %v119
  %v144 = vpack.c.b16 %v122, %v121
  %v145 = vpack.c.b16 %v124, %v123
  %v146 = vpack.c.b16 %v126, %v125
  %v147 = vpack.c.b16 %v128, %v127
  %v148 = vpack.c.b16 %v130, %v129
  %v149 = vpack.c.b16 %v132, %v131
  %v150 = vpack.c.b16 %v134, %v133
  %167 = vmatprep.subr.bf16.mxu0 0
  %168 = vmatpush1.bf16.msra.mxu0 %v135
  %169 = vmatprep.subr.bf16.mxu0 0
  %170 = vmatpush1.bf16.msra.mxu0 %v136
  %171 = vmatprep.subr.bf16.mxu0 0
  %172 = vmatpush1.bf16.msra.mxu0 %v137
  %173 = vmatprep.subr.bf16.mxu0 0
  %174 = vmatpush1.bf16.msra.mxu0 %v138
  %175 = vmatprep.subr.bf16.mxu0 0
  %176 = vmatpush1.bf16.msra.mxu0 %v139
  %177 = vmatprep.subr.bf16.mxu0 0
  %178 = vmatpush1.bf16.msra.mxu0 %v140
  %179 = vmatprep.subr.bf16.mxu0 0
  %180 = vmatpush1.bf16.msra.mxu0 %v141
  %181 = vmatprep.subr.bf16.mxu0 0
  %182 = vmatpush1.bf16.msra.mxu0 %v142
  %183 = vmatprep.subr.bf16.mxu0 0
  %184 = vmatpush1.bf16.msra.mxu0 %v143
  %185 = vmatprep.subr.bf16.mxu0 0
  %186 = vmatpush1.bf16.msra.mxu0 %v144
  %187 = vmatprep.subr.bf16.mxu0 0
  %188 = vmatpush1.bf16.msra.mxu0 %v145
  %189 = vmatprep.subr.bf16.mxu0 0
  %190 = vmatpush1.bf16.msra.mxu0 %v146
  %191 = vmatprep.subr.bf16.mxu0 0
  %192 = vmatpush1.bf16.msra.mxu0 %v147
  %193 = vmatprep.subr.bf16.mxu0 0
  %194 = vmatpush1.bf16.msra.mxu0 %v148
  %195 = vmatprep.subr.bf16.mxu0 0
  %196 = vmatpush1.bf16.msra.mxu0 %v149
  %197 = vmatprep.subr.bf16.mxu0 0
  %198 = vmatpush1.bf16.msra.mxu0 %v150
  %199 = vmatprep.mubr.bf16.mxu0 %v38
  %200 = vmatmul.mubr.bf16.gmra.mrb[0].mxu0 %v37
  %v201 = vpop.f32.mrb[0].mxu0
  %v202 = vadd.f32 0.0, %v201
  %v203 = vpop.f32.mrb[0].mxu0
  %v204 = vpop.f32.mrb[0].mxu0
  %v205 = vadd.f32 0.0, %v204
  %v206 = vpop.f32.mrb[0].mxu0
  %207 = vdwg.mxu0
  %v208 = vpack.c.bf16 %v205, %v202
  %v209 = vld [vmem:[%s2] sm:$0xf]
  %v210 = vld [vmem:[%s2 + $0x4] sm:$0xf]
  %v211 = vld [vmem:[%s2 + $0x8] sm:$0xf]
  %v212 = vld [vmem:[%s2 + $0xc] sm:$0xf]
  %v213 = vld [vmem:[%s2 + $0x10] sm:$0xf]
  %v214 = vld [vmem:[%s2 + $0x14] sm:$0xf]
  %v215 = vld [vmem:[%s2 + $0x18] sm:$0xf]
  %v216 = vld [vmem:[%s2 + $0x1c] sm:$0xf]
  %v217 = vld [vmem:[%s2 + $0x20] sm:$0xf]
  %v218 = vld [vmem:[%s2 + $0x24] sm:$0xf]
  %v219 = vld [vmem:[%s2 + $0x28] sm:$0xf]
  %v220 = vld [vmem:[%s2 + $0x2c] sm:$0xf]
  %v221 = vld [vmem:[%s2 + $0x30] sm:$0xf]
  %v222 = vld [vmem:[%s2 + $0x34] sm:$0xf]
  %v223 = vld [vmem:[%s2 + $0x38] sm:$0xf]
  %v224 = vld [vmem:[%s2 + $0x3c] sm:$0xf]
  %v225 = vld [vmem:[%s3] sm:$0x1]
  %v227 = vlaneseq
  %v228 = vshrl.u32 %v227, 7
  %v229 = vsub.s32 0, %v228
  %v230 = vrot.slane %v225, %v229
  %v248 = vunpack.c.l.b16 %v209
  %v249 = vunpack.c.l.b16 %v210
  %v250 = vunpack.c.l.b16 %v211
  %v251 = vunpack.c.l.b16 %v212
  %v252 = vunpack.c.l.b16 %v213
  %v253 = vunpack.c.l.b16 %v214
  %v254 = vunpack.c.l.b16 %v215
  %v255 = vunpack.c.l.b16 %v216
  %v256 = vunpack.c.l.b16 %v217
  %v257 = vunpack.c.l.b16 %v218
  %v258 = vunpack.c.l.b16 %v219
  %v259 = vunpack.c.l.b16 %v220
  %v260 = vunpack.c.l.b16 %v221
  %v261 = vunpack.c.l.b16 %v222
  %v262 = vunpack.c.l.b16 %v223
  %v263 = vunpack.c.l.b16 %v224
  %v264 = vpack.c.b16 %v249, %v248
  %v265 = vpack.c.b16 %v251, %v250
  %v266 = vpack.c.b16 %v253, %v252
  %v267 = vpack.c.b16 %v255, %v254
  %v268 = vpack.c.b16 %v257, %v256
  %v269 = vpack.c.b16 %v259, %v258
  %v270 = vpack.c.b16 %v261, %v260
  %v271 = vpack.c.b16 %v263, %v262
  %280 = vmatprep.subr.bf16.mxu0 0
  %281 = vmatpush1.bf16.msra.mxu0 %v264
  %282 = vmatprep.subr.bf16.mxu0 0
  %283 = vmatpush1.bf16.msra.mxu0 %v265
  %284 = vmatprep.subr.bf16.mxu0 0
  %285 = vmatpush1.bf16.msra.mxu0 %v266
  %286 = vmatprep.subr.bf16.mxu0 0
  %287 = vmatpush1.bf16.msra.mxu0 %v267
  %288 = vmatprep.subr.bf16.mxu0 0
  %289 = vmatpush1.bf16.msra.mxu0 %v268
  %290 = vmatprep.subr.bf16.mxu0 0
  %291 = vmatpush1.bf16.msra.mxu0 %v269
  %292 = vmatprep.subr.bf16.mxu0 0
  %293 = vmatpush1.bf16.msra.mxu0 %v270
  %294 = vmatprep.subr.bf16.mxu0 0
  %295 = vmatpush1.bf16.msra.mxu0 %v271
  %296 = vmatprep.subr.bf16.mxu0 0
  %297 = vmatpush1.bf16.msra.mxu0 0
  %298 = vmatprep.subr.bf16.mxu0 0
  %299 = vmatpush1.bf16.msra.mxu0 0
  %300 = vmatprep.subr.bf16.mxu0 0
  %301 = vmatpush1.bf16.msra.mxu0 0
  %302 = vmatprep.subr.bf16.mxu0 0
  %303 = vmatpush1.bf16.msra.mxu0 0
  %304 = vmatprep.subr.bf16.mxu0 0
  %305 = vmatpush1.bf16.msra.mxu0 0
  %306 = vmatprep.subr.bf16.mxu0 0
  %307 = vmatpush1.bf16.msra.mxu0 0
  %308 = vmatprep.subr.bf16.mxu0 0
  %309 = vmatpush1.bf16.msra.mxu0 0
  %310 = vmatprep.subr.bf16.mxu0 0
  %311 = vmatpush1.bf16.msra.mxu0 0
  %312 = vmatprep.mubr.bf16.mxu0 0
  %313 = vmatmul.mubr.bf16.gmra.mrb[0].mxu0 %v208
  %v314 = vpop.f32.mrb[0].mxu0
  %v315 = vadd.f32 %v230, %v314
  %v316 = vpop.f32.mrb[0].mxu0
  %v317 = vpop.f32.mrb[0].mxu0
  %v318 = vadd.f32 %v230, %v317
  %v319 = vpop.f32.mrb[0].mxu0
  %320 = vdwg.mxu0
  %v321 = vtanh.pop %v315
  %v322 = vtanh.pop %v318
  %v323 = vpack.c.bf16 %v322, %v321
  %v325 = vunpack.c.l.b16 %v323
  %v326 = vunpack.c.h.b16 %v323
  %v327 = vpack.c.b16 %v325, %v325
  %v328 = vpack.c.b16 %v326, %v326
  %331 = vst [vmem:[%s4] sm:$0xf] %v327
  %332 = vst [vmem:[%s4 + $0x4] sm:$0xf] %v328
  // Predicated region
  $region18: #{seq2seq_model_forward.5} parent=0 // pred_check
    _
  $region19: #{seq2seq_model_forward.5} parent=0 // pred_check_branch
    %334 = sbr.rel (0) target = $region21
  $region20: #{seq2seq_model_forward.5} parent=0 // pred_region
    _
  $region21: #{seq2seq_model_forward.5} parent=0 // pred_fallthru
    _
  // Predicated region
  $region22: #{seq2seq_model_forward.5} parent=0 // pred_check
    _
  $region23: #{seq2seq_model_forward.5} parent=0 // pred_check_branch
    %336 = sbr.rel (0) target = $region25
  $region24: #{seq2seq_model_forward.5} parent=0 // pred_region
    _
  $region25: #{seq2seq_model_forward.5} parent=0 // pred_fallthru
    _

// kernel: seq2seq_model_forward.4
$region0: #{seq2seq_model_forward.4}
  #allocation0 [shape = 'u32[]', space=smem, size = 0x4, offset = 0x4, fixed_abs, tag = 'smem constant byte address 0x4 - core index']
  #allocation1 [shape = 'u32[144,128]{1,0:T(1,128)}', space=vmem, size = 0x12000, scoped, tag = 'internal scratch']
  %s0 = inlined_call_operand.vmem [shape: s32[16,1], index: 0, kind: input, shape index: {}]
  %s1 = inlined_call_operand.hbm [shape: bf16[256,128], index: 1, kind: input, shape index: {}]
  %s2 = inlined_call_operand.hbm [shape: bf16[128,128], index: 2, kind: input, shape index: {}]
  %s3 = inlined_call_operand.vmem [shape: f32[1,128], index: 3, kind: input, shape index: {}]
  %s4 = inlined_call_operand.vmem [shape: bf16[16,128], index: 4, kind: output, shape index: {}]
  %s5 = sld [smem:[#allocation0]]
  $region34: #{seq2seq_model_forward.4} parent=0
    _
  %s7 = ssub.s32 1, %s5
  %s8 = scalar_select 0, %s7, %s5
  $region1: #{seq2seq_model_forward.4} parent=0
    #allocation2 [shape = 'u8[65536]{0}', space=vmem, size = 0x10000, scoped, tag = 'input window, operand 1, single buffered']
    #allocation3 [shape = 's32[1]{0}', space=sflag, size = 0x4, scoped, tag = 'scoped memory for seq2seq_model_forward.4']
    #allocation4 [shape = 'u8[32768]{0}', space=vmem, size = 0x8000, scoped, tag = 'input window, operand 2, single buffered']
    #allocation5 [shape = 's32[1]{0}', space=sflag, size = 0x4, scoped, tag = 'scoped memory for seq2seq_model_forward.4']
    %9 = vsyncpa [#allocation3], 0
    %10 = vsyncpa [#allocation5], 0
    // Predicated region
    $region2: #{seq2seq_model_forward.4} parent=1 // pred_check
      _
    $region3: #{seq2seq_model_forward.4} parent=1 // pred_check_branch
      %12 = sbr.rel (0) target = $region5
    $region4: #{seq2seq_model_forward.4} parent=1 // pred_region
      _
    $region5: #{seq2seq_model_forward.4} parent=1 // pred_fallthru
      _
    // Predicated region
    $region6: #{seq2seq_model_forward.4} parent=1 // pred_check
      _
    $region7: #{seq2seq_model_forward.4} parent=1 // pred_check_branch
      %14 = sbr.rel (0) target = $region9
    $region8: #{seq2seq_model_forward.4} parent=1 // pred_region
      %s16 = ssub.s32 2048, 2048
      %17 = vsyncadd [#allocation3], %s16
      %s18 = sshll.u32 [#allocation2], 4
      %s19 = int_to_ptr.vmem [resolvable:$true] %s18
      %24 = dma.hbm_to_vmem [thread:$0]  %s1, 2048, %s19, [#allocation3], 64, 64, 4
    $region9: #{seq2seq_model_forward.4} parent=1 // pred_fallthru
      _
    // Predicated region
    $region10: #{seq2seq_model_forward.4} parent=1 // pred_check
      _
    $region11: #{seq2seq_model_forward.4} parent=1 // pred_check_branch
      %26 = sbr.rel (0) target = $region13
    $region12: #{seq2seq_model_forward.4} parent=1 // pred_region
      %s28 = ssub.s32 1024, 1024
      %29 = vsyncadd [#allocation5], %s28
      %s30 = sshll.u32 [#allocation4], 4
      %s31 = int_to_ptr.vmem [resolvable:$true] %s30
      %36 = dma.hbm_to_vmem [thread:$0]  %s2, 1024, %s31, [#allocation5], 64, 64, 4
    $region13: #{seq2seq_model_forward.4} parent=1 // pred_fallthru
      _
    // Predicated region
    $region14: #{seq2seq_model_forward.4} parent=1 // pred_check
      _
    $region15: #{seq2seq_model_forward.4} parent=1 // pred_check_branch
      %38 = sbr.rel (0) target = $region17
    $region16: #{seq2seq_model_forward.4} parent=1 // pred_region
      _
    $region17: #{seq2seq_model_forward.4} parent=1 // pred_fallthru
      _
    // Predicated region
    $region18: #{seq2seq_model_forward.4} parent=1 // pred_check
      _
    $region19: #{seq2seq_model_forward.4} parent=1 // pred_check_branch
      %40 = sbr.rel (0) target = $region21
    $region20: #{seq2seq_model_forward.4} parent=1 // pred_region
      %41 = dma.done [#allocation3], 2048
    $region21: #{seq2seq_model_forward.4} parent=1 // pred_fallthru
      _
    // Predicated region
    $region22: #{seq2seq_model_forward.4} parent=1 // pred_check
      _
    $region23: #{seq2seq_model_forward.4} parent=1 // pred_check_branch
      %43 = sbr.rel (0) target = $region25
    $region24: #{seq2seq_model_forward.4} parent=1 // pred_region
      %44 = dma.done [#allocation5], 1024
    $region25: #{seq2seq_model_forward.4} parent=1 // pred_fallthru
      _
    %v46 = vld [vmem:[%s0] sm:$0xff]
    %v47 = vld [vmem:[%s0 + $0x8] sm:$0xff]
    %v48 = vlaneseq
    %v49 = vand.u32 %v48, 127
    %v50 = vadd.s32 %v49, 128
    %51 = vset.pattern.permute.xlu0 0
    %52 = vperm.xlu0 %51, %v46
    %v53 = vpop.permute.xlu0 %52
    %54 = vset.pattern.permute.xlu0 0
    %55 = vperm.xlu0 %54, %v47
    %v56 = vpop.permute.xlu0 %55
    %vm57 = vcmp.eq.s32.totalorder %v49, %v53
    %vm58 = vcmp.eq.s32.totalorder %v50, %v53
    %vm59 = vcmp.eq.s32.totalorder %v49, %v56
    %vm60 = vcmp.eq.s32.totalorder %v50, %v56
    %v61 = vsel %vm57, 1.0, 0.0
    %v62 = vsel %vm58, 1.0, 0.0
    %v63 = vsel %vm59, 1.0, 0.0
    %v64 = vsel %vm60, 1.0, 0.0
    %v65 = vpack.c.bf16 %v63, %v61
    %v66 = vpack.c.bf16 %v64, %v62
    %v67 = vld [vmem:[#allocation2] sm:$0xf]
    %v68 = vld [vmem:[#allocation2 + $0x4] sm:$0xf]
    %v69 = vld [vmem:[#allocation2 + $0x8] sm:$0xf]
    %v70 = vld [vmem:[#allocation2 + $0xc] sm:$0xf]
    %v71 = vld [vmem:[#allocation2 + $0x10] sm:$0xf]
    %v72 = vld [vmem:[#allocation2 + $0x14] sm:$0xf]
    %v73 = vld [vmem:[#allocation2 + $0x18] sm:$0xf]
    %v74 = vld [vmem:[#allocation2 + $0x1c] sm:$0xf]
    %v75 = vld [vmem:[#allocation2 + $0x20] sm:$0xf]
    %v76 = vld [vmem:[#allocation2 + $0x24] sm:$0xf]
    %v77 = vld [vmem:[#allocation2 + $0x28] sm:$0xf]
    %v78 = vld [vmem:[#allocation2 + $0x2c] sm:$0xf]
    %v79 = vld [vmem:[#allocation2 + $0x30] sm:$0xf]
    %v80 = vld [vmem:[#allocation2 + $0x34] sm:$0xf]
    %v81 = vld [vmem:[#allocation2 + $0x38] sm:$0xf]
    %v82 = vld [vmem:[#allocation2 + $0x3c] sm:$0xf]
    %v83 = vld [vmem:[#allocation2 + $0x40] sm:$0xf]
    %v84 = vld [vmem:[#allocation2 + $0x44] sm:$0xf]
    %v85 = vld [vmem:[#allocation2 + $0x48] sm:$0xf]
    %v86 = vld [vmem:[#allocation2 + $0x4c] sm:$0xf]
    %v87 = vld [vmem:[#allocation2 + $0x50] sm:$0xf]
    %v88 = vld [vmem:[#allocation2 + $0x54] sm:$0xf]
    %v89 = vld [vmem:[#allocation2 + $0x58] sm:$0xf]
    %v90 = vld [vmem:[#allocation2 + $0x5c] sm:$0xf]
    %v91 = vld [vmem:[#allocation2 + $0x60] sm:$0xf]
    %v92 = vld [vmem:[#allocation2 + $0x64] sm:$0xf]
    %v93 = vld [vmem:[#allocation2 + $0x68] sm:$0xf]
    %v94 = vld [vmem:[#allocation2 + $0x6c] sm:$0xf]
    %v95 = vld [vmem:[#allocation2 + $0x70] sm:$0xf]
    %v96 = vld [vmem:[#allocation2 + $0x74] sm:$0xf]
    %v97 = vld [vmem:[#allocation2 + $0x78] sm:$0xf]
    %v98 = vld [vmem:[#allocation2 + $0x7c] sm:$0xf]
    %v131 = vunpack.c.l.b16 %v67
    %v132 = vunpack.c.l.b16 %v68
    %v133 = vunpack.c.l.b16 %v69
    %v134 = vunpack.c.l.b16 %v70
    %v135 = vunpack.c.l.b16 %v71
    %v136 = vunpack.c.l.b16 %v72
    %v137 = vunpack.c.l.b16 %v73
    %v138 = vunpack.c.l.b16 %v74
    %v139 = vunpack.c.l.b16 %v75
    %v140 = vunpack.c.l.b16 %v76
    %v141 = vunpack.c.l.b16 %v77
    %v142 = vunpack.c.l.b16 %v78
    %v143 = vunpack.c.l.b16 %v79
    %v144 = vunpack.c.l.b16 %v80
    %v145 = vunpack.c.l.b16 %v81
    %v146 = vunpack.c.l.b16 %v82
    %v147 = vunpack.c.l.b16 %v83
    %v148 = vunpack.c.l.b16 %v84
    %v149 = vunpack.c.l.b16 %v85
    %v150 = vunpack.c.l.b16 %v86
    %v151 = vunpack.c.l.b16 %v87
    %v152 = vunpack.c.l.b16 %v88
    %v153 = vunpack.c.l.b16 %v89
    %v154 = vunpack.c.l.b16 %v90
    %v155 = vunpack.c.l.b16 %v91
    %v156 = vunpack.c.l.b16 %v92
    %v157 = vunpack.c.l.b16 %v93
    %v158 = vunpack.c.l.b16 %v94
    %v159 = vunpack.c.l.b16 %v95
    %v160 = vunpack.c.l.b16 %v96
    %v161 = vunpack.c.l.b16 %v97
    %v162 = vunpack.c.l.b16 %v98
    %v163 = vpack.c.b16 %v132, %v131
    %v164 = vpack.c.b16 %v134, %v133
    %v165 = vpack.c.b16 %v136, %v135
    %v166 = vpack.c.b16 %v138, %v137
    %v167 = vpack.c.b16 %v140, %v139
    %v168 = vpack.c.b16 %v142, %v141
    %v169 = vpack.c.b16 %v144, %v143
    %v170 = vpack.c.b16 %v146, %v145
    %v171 = vpack.c.b16 %v148, %v147
    %v172 = vpack.c.b16 %v150, %v149
    %v173 = vpack.c.b16 %v152, %v151
    %v174 = vpack.c.b16 %v154, %v153
    %v175 = vpack.c.b16 %v156, %v155
    %v176 = vpack.c.b16 %v158, %v157
    %v177 = vpack.c.b16 %v160, %v159
    %v178 = vpack.c.b16 %v162, %v161
    %195 = vmatprep.subr.bf16.mxu0 0
    %196 = vmatpush1.bf16.msra.mxu0 %v163
    %197 = vmatprep.subr.bf16.mxu0 0
    %198 = vmatpush1.bf16.msra.mxu0 %v164
    %199 = vmatprep.subr.bf16.mxu0 0
    %200 = vmatpush1.bf16.msra.mxu0 %v165
    %201 = vmatprep.subr.bf16.mxu0 0
    %202 = vmatpush1.bf16.msra.mxu0 %v166
    %203 = vmatprep.subr.bf16.mxu0 0
    %204 = vmatpush1.bf16.msra.mxu0 %v167
    %205 = vmatprep.subr.bf16.mxu0 0
    %206 = vmatpush1.bf16.msra.mxu0 %v168
    %207 = vmatprep.subr.bf16.mxu0 0
    %208 = vmatpush1.bf16.msra.mxu0 %v169
    %209 = vmatprep.subr.bf16.mxu0 0
    %210 = vmatpush1.bf16.msra.mxu0 %v170
    %211 = vmatprep.subr.bf16.mxu0 0
    %212 = vmatpush1.bf16.msra.mxu0 %v171
    %213 = vmatprep.subr.bf16.mxu0 0
    %214 = vmatpush1.bf16.msra.mxu0 %v172
    %215 = vmatprep.subr.bf16.mxu0 0
    %216 = vmatpush1.bf16.msra.mxu0 %v173
    %217 = vmatprep.subr.bf16.mxu0 0
    %218 = vmatpush1.bf16.msra.mxu0 %v174
    %219 = vmatprep.subr.bf16.mxu0 0
    %220 = vmatpush1.bf16.msra.mxu0 %v175
    %221 = vmatprep.subr.bf16.mxu0 0
    %222 = vmatpush1.bf16.msra.mxu0 %v176
    %223 = vmatprep.subr.bf16.mxu0 0
    %224 = vmatpush1.bf16.msra.mxu0 %v177
    %225 = vmatprep.subr.bf16.mxu0 0
    %226 = vmatpush1.bf16.msra.mxu0 %v178
    %227 = vmatprep.mubr.bf16.mxu0 %v66
    %228 = vmatmul.mubr.bf16.gmra.mrb[0].mxu0 %v65
    %v229 = vpop.f32.mrb[0].mxu0
    %v230 = vadd.f32 0.0, %v229
    %v231 = vpop.f32.mrb[0].mxu0
    %v232 = vpop.f32.mrb[0].mxu0
    %v233 = vadd.f32 0.0, %v232
    %v234 = vpop.f32.mrb[0].mxu0
    %235 = vdwg.mxu0
    %v236 = vpack.c.bf16 %v233, %v230
    %v237 = vld [vmem:[#allocation4] sm:$0xf]
    %v238 = vld [vmem:[#allocation4 + $0x4] sm:$0xf]
    %v239 = vld [vmem:[#allocation4 + $0x8] sm:$0xf]
    %v240 = vld [vmem:[#allocation4 + $0xc] sm:$0xf]
    %v241 = vld [vmem:[#allocation4 + $0x10] sm:$0xf]
    %v242 = vld [vmem:[#allocation4 + $0x14] sm:$0xf]
    %v243 = vld [vmem:[#allocation4 + $0x18] sm:$0xf]
    %v244 = vld [vmem:[#allocation4 + $0x1c] sm:$0xf]
    %v245 = vld [vmem:[#allocation4 + $0x20] sm:$0xf]
    %v246 = vld [vmem:[#allocation4 + $0x24] sm:$0xf]
    %v247 = vld [vmem:[#allocation4 + $0x28] sm:$0xf]
    %v248 = vld [vmem:[#allocation4 + $0x2c] sm:$0xf]
    %v249 = vld [vmem:[#allocation4 + $0x30] sm:$0xf]
    %v250 = vld [vmem:[#allocation4 + $0x34] sm:$0xf]
    %v251 = vld [vmem:[#allocation4 + $0x38] sm:$0xf]
    %v252 = vld [vmem:[#allocation4 + $0x3c] sm:$0xf]
    %v253 = vld [vmem:[%s3] sm:$0x1]
    %v255 = vlaneseq
    %v256 = vshrl.u32 %v255, 7
    %v257 = vsub.s32 0, %v256
    %v258 = vrot.slane %v253, %v257
    %v276 = vunpack.c.l.b16 %v237
    %v277 = vunpack.c.l.b16 %v238
    %v278 = vunpack.c.l.b16 %v239
    %v279 = vunpack.c.l.b16 %v240
    %v280 = vunpack.c.l.b16 %v241
    %v281 = vunpack.c.l.b16 %v242
    %v282 = vunpack.c.l.b16 %v243
    %v283 = vunpack.c.l.b16 %v244
    %v284 = vunpack.c.l.b16 %v245
    %v285 = vunpack.c.l.b16 %v246
    %v286 = vunpack.c.l.b16 %v247
    %v287 = vunpack.c.l.b16 %v248
    %v288 = vunpack.c.l.b16 %v249
    %v289 = vunpack.c.l.b16 %v250
    %v290 = vunpack.c.l.b16 %v251
    %v291 = vunpack.c.l.b16 %v252
    %v292 = vpack.c.b16 %v277, %v276
    %v293 = vpack.c.b16 %v279, %v278
    %v294 = vpack.c.b16 %v281, %v280
    %v295 = vpack.c.b16 %v283, %v282
    %v296 = vpack.c.b16 %v285, %v284
    %v297 = vpack.c.b16 %v287, %v286
    %v298 = vpack.c.b16 %v289, %v288
    %v299 = vpack.c.b16 %v291, %v290
    %308 = vmatprep.subr.bf16.mxu0 0
    %309 = vmatpush1.bf16.msra.mxu0 %v292
    %310 = vmatprep.subr.bf16.mxu0 0
    %311 = vmatpush1.bf16.msra.mxu0 %v293
    %312 = vmatprep.subr.bf16.mxu0 0
    %313 = vmatpush1.bf16.msra.mxu0 %v294
    %314 = vmatprep.subr.bf16.mxu0 0
    %315 = vmatpush1.bf16.msra.mxu0 %v295
    %316 = vmatprep.subr.bf16.mxu0 0
    %317 = vmatpush1.bf16.msra.mxu0 %v296
    %318 = vmatprep.subr.bf16.mxu0 0
    %319 = vmatpush1.bf16.msra.mxu0 %v297
    %320 = vmatprep.subr.bf16.mxu0 0
    %321 = vmatpush1.bf16.msra.mxu0 %v298
    %322 = vmatprep.subr.bf16.mxu0 0
    %323 = vmatpush1.bf16.msra.mxu0 %v299
    %324 = vmatprep.subr.bf16.mxu0 0
    %325 = vmatpush1.bf16.msra.mxu0 0
    %326 = vmatprep.subr.bf16.mxu0 0
    %327 = vmatpush1.bf16.msra.mxu0 0
    %328 = vmatprep.subr.bf16.mxu0 0
    %329 = vmatpush1.bf16.msra.mxu0 0
    %330 = vmatprep.subr.bf16.mxu0 0
    %331 = vmatpush1.bf16.msra.mxu0 0
    %332 = vmatprep.subr.bf16.mxu0 0
    %333 = vmatpush1.bf16.msra.mxu0 0
    %334 = vmatprep.subr.bf16.mxu0 0
    %335 = vmatpush1.bf16.msra.mxu0 0
    %336 = vmatprep.subr.bf16.mxu0 0
    %337 = vmatpush1.bf16.msra.mxu0 0
    %338 = vmatprep.subr.bf16.mxu0 0
    %339 = vmatpush1.bf16.msra.mxu0 0
    %340 = vmatprep.mubr.bf16.mxu0 0
    %341 = vmatmul.mubr.bf16.gmra.mrb[0].mxu0 %v236
    %v342 = vpop.f32.mrb[0].mxu0
    %v343 = vadd.f32 %v258, %v342
    %v344 = vpop.f32.mrb[0].mxu0
    %v345 = vpop.f32.mrb[0].mxu0
    %v346 = vadd.f32 %v258, %v345
    %v347 = vpop.f32.mrb[0].mxu0
    %348 = vdwg.mxu0
    %v349 = vtanh.pop %v343
    %v350 = vtanh.pop %v346
    %v351 = vpack.c.bf16 %v350, %v349
    %v353 = vunpack.c.l.b16 %v351
    %v354 = vunpack.c.h.b16 %v351
    %v355 = vpack.c.b16 %v353, %v353
    %v356 = vpack.c.b16 %v354, %v354
    %359 = vst [vmem:[%s4] sm:$0xf] %v355
    %360 = vst [vmem:[%s4 + $0x4] sm:$0xf] %v356
    // Predicated region
    $region26: #{seq2seq_model_forward.4} parent=1 // pred_check
      _
    $region27: #{seq2seq_model_forward.4} parent=1 // pred_check_branch
      %362 = sbr.rel (0) target = $region29
    $region28: #{seq2seq_model_forward.4} parent=1 // pred_region
      _
    $region29: #{seq2seq_model_forward.4} parent=1 // pred_fallthru
      _
    // Predicated region
    $region30: #{seq2seq_model_forward.4} parent=1 // pred_check
      _
    $region31: #{seq2seq_model_forward.4} parent=1 // pred_check_branch
      %364 = sbr.rel (0) target = $region33
    $region32: #{seq2seq_model_forward.4} parent=1 // pred_region
      _
    $region33: #{seq2seq_model_forward.4} parent=1 // pred_fallthru
      _
    %365 = vsyncpa [#allocation3], 1
    %366 = vsyncpa [#allocation5], 1

// kernel: seq2seq_model_forward.7
$region0: #{seq2seq_model_forward.7}
  #allocation0 [shape = 'u32[]', space=smem, size = 0x4, offset = 0x4, fixed_abs, tag = 'smem constant byte address 0x4 - core index']
  #allocation1 [shape = 'u32[144,128]{1,0:T(1,128)}', space=vmem, size = 0x12000, scoped, tag = 'internal scratch']
  %s0 = inlined_call_operand.vmem [shape: bf16[16,128], index: 0, kind: input, shape index: {}]
  %s1 = inlined_call_operand.vmem [shape: bf16[128,128], index: 1, kind: input, shape index: {}]
  %s2 = inlined_call_operand.vmem [shape: bf16[128,256], index: 2, kind: input, shape index: {}]
  %s3 = inlined_call_operand.hbm [shape: f32[16,256], index: 3, kind: output, shape index: {}]
  %s4 = sld [smem:[#allocation0]]
  $region22: #{seq2seq_model_forward.7} parent=0
    _
  %s6 = ssub.s32 1, %s4
  %s7 = scalar_select 0, %s6, %s4
  $region1: #{seq2seq_model_forward.7} parent=0
    #allocation2 [shape = 'u8[16384]{0}', space=vmem, size = 0x4000, scoped, tag = 'output window, operand 0, single buffered']
    #allocation3 [shape = 's32[1]{0}', space=sflag, size = 0x4, scoped, tag = 'scoped memory for seq2seq_model_forward.7']
    %8 = vsyncpa [#allocation3], 0
    // Predicated region
    $region2: #{seq2seq_model_forward.7} parent=1 // pred_check
      _
    $region3: #{seq2seq_model_forward.7} parent=1 // pred_check_branch
      %10 = sbr.rel (0) target = $region5
    $region4: #{seq2seq_model_forward.7} parent=1 // pred_region
      _
    $region5: #{seq2seq_model_forward.7} parent=1 // pred_fallthru
      _
    // Predicated region
    $region6: #{seq2seq_model_forward.7} parent=1 // pred_check
      _
    $region7: #{seq2seq_model_forward.7} parent=1 // pred_check_branch
      %12 = sbr.rel (0) target = $region9
    $region8: #{seq2seq_model_forward.7} parent=1 // pred_region
      _
    $region9: #{seq2seq_model_forward.7} parent=1 // pred_fallthru
      _
    // Predicated region
    $region10: #{seq2seq_model_forward.7} parent=1 // pred_check
      _
    $region11: #{seq2seq_model_forward.7} parent=1 // pred_check_branch
      %14 = sbr.rel (0) target = $region13
    $region12: #{seq2seq_model_forward.7} parent=1 // pred_region
      _
    $region13: #{seq2seq_model_forward.7} parent=1 // pred_fallthru
      _
    %v16 = vld [vmem:[%s0] sm:$0xf]
    %v17 = vld [vmem:[%s0 + $0x4] sm:$0xf]
    %v18 = vld [vmem:[%s1] sm:$0xf]
    %v19 = vld [vmem:[%s1 + $0x4] sm:$0xf]
    %v20 = vld [vmem:[%s1 + $0x8] sm:$0xf]
    %v21 = vld [vmem:[%s1 + $0xc] sm:$0xf]
    %v22 = vld [vmem:[%s1 + $0x10] sm:$0xf]
    %v23 = vld [vmem:[%s1 + $0x14] sm:$0xf]
    %v24 = vld [vmem:[%s1 + $0x18] sm:$0xf]
    %v25 = vld [vmem:[%s1 + $0x1c] sm:$0xf]
    %v26 = vld [vmem:[%s1 + $0x20] sm:$0xf]
    %v27 = vld [vmem:[%s1 + $0x24] sm:$0xf]
    %v28 = vld [vmem:[%s1 + $0x28] sm:$0xf]
    %v29 = vld [vmem:[%s1 + $0x2c] sm:$0xf]
    %v30 = vld [vmem:[%s1 + $0x30] sm:$0xf]
    %v31 = vld [vmem:[%s1 + $0x34] sm:$0xf]
    %v32 = vld [vmem:[%s1 + $0x38] sm:$0xf]
    %v33 = vld [vmem:[%s1 + $0x3c] sm:$0xf]
    %v36 = vunpack.c.l.b16 %v16
    %v37 = vunpack.c.l.b16 %v17
    %v38 = vpack.c.b16 %v37, %v36
    %v56 = vunpack.c.l.b16 %v18
    %v57 = vunpack.c.l.b16 %v19
    %v58 = vunpack.c.l.b16 %v20
    %v59 = vunpack.c.l.b16 %v21
    %v60 = vunpack.c.l.b16 %v22
    %v61 = vunpack.c.l.b16 %v23
    %v62 = vunpack.c.l.b16 %v24
    %v63 = vunpack.c.l.b16 %v25
    %v64 = vunpack.c.l.b16 %v26
    %v65 = vunpack.c.l.b16 %v27
    %v66 = vunpack.c.l.b16 %v28
    %v67 = vunpack.c.l.b16 %v29
    %v68 = vunpack.c.l.b16 %v30
    %v69 = vunpack.c.l.b16 %v31
    %v70 = vunpack.c.l.b16 %v32
    %v71 = vunpack.c.l.b16 %v33
    %v72 = vpack.c.b16 %v57, %v56
    %v73 = vpack.c.b16 %v59, %v58
    %v74 = vpack.c.b16 %v61, %v60
    %v75 = vpack.c.b16 %v63, %v62
    %v76 = vpack.c.b16 %v65, %v64
    %v77 = vpack.c.b16 %v67, %v66
    %v78 = vpack.c.b16 %v69, %v68
    %v79 = vpack.c.b16 %v71, %v70
    %88 = vmatprep.subr.bf16.mxu0 0
    %89 = vmatpush1.bf16.msra.mxu0 %v72
    %90 = vmatprep.subr.bf16.mxu0 0
    %91 = vmatpush1.bf16.msra.mxu0 %v73
    %92 = vmatprep.subr.bf16.mxu0 0
    %93 = vmatpush1.bf16.msra.mxu0 %v74
    %94 = vmatprep.subr.bf16.mxu0 0
    %95 = vmatpush1.bf16.msra.mxu0 %v75
    %96 = vmatprep.subr.bf16.mxu0 0
    %97 = vmatpush1.bf16.msra.mxu0 %v76
    %98 = vmatprep.subr.bf16.mxu0 0
    %99 = vmatpush1.bf16.msra.mxu0 %v77
    %100 = vmatprep.subr.bf16.mxu0 0
    %101 = vmatpush1.bf16.msra.mxu0 %v78
    %102 = vmatprep.subr.bf16.mxu0 0
    %103 = vmatpush1.bf16.msra.mxu0 %v79
    %104 = vmatprep.subr.bf16.mxu0 0
    %105 = vmatpush1.bf16.msra.mxu0 0
    %106 = vmatprep.subr.bf16.mxu0 0
    %107 = vmatpush1.bf16.msra.mxu0 0
    %108 = vmatprep.subr.bf16.mxu0 0
    %109 = vmatpush1.bf16.msra.mxu0 0
    %110 = vmatprep.subr.bf16.mxu0 0
    %111 = vmatpush1.bf16.msra.mxu0 0
    %112 = vmatprep.subr.bf16.mxu0 0
    %113 = vmatpush1.bf16.msra.mxu0 0
    %114 = vmatprep.subr.bf16.mxu0 0
    %115 = vmatpush1.bf16.msra.mxu0 0
    %116 = vmatprep.subr.bf16.mxu0 0
    %117 = vmatpush1.bf16.msra.mxu0 0
    %118 = vmatprep.subr.bf16.mxu0 0
    %119 = vmatpush1.bf16.msra.mxu0 0
    %120 = vmatprep.mubr.bf16.mxu0 0
    %121 = vmatmul.mubr.bf16.gmra.mrb[0].mxu0 %v38
    %v122 = vpop.f32.mrb[0].mxu0
    %v123 = vadd.f32 0.0, %v122
    %v124 = vpop.f32.mrb[0].mxu0
    %v125 = vpop.f32.mrb[0].mxu0
    %v126 = vadd.f32 0.0, %v125
    %v127 = vpop.f32.mrb[0].mxu0
    %128 = vdwg.mxu0
    %v129 = vtanh.pop %v123
    %v130 = vtanh.pop %v126
    %v131 = vpack.c.bf16 %v130, %v129
    %v132 = vld [vmem:[%s2] sm:$0xff]
    %v133 = vld [vmem:[%s2 + $0x8] sm:$0xff]
    %v134 = vld [vmem:[%s2 + $0x10] sm:$0xff]
    %v135 = vld [vmem:[%s2 + $0x18] sm:$0xff]
    %v136 = vld [vmem:[%s2 + $0x20] sm:$0xff]
    %v137 = vld [vmem:[%s2 + $0x28] sm:$0xff]
    %v138 = vld [vmem:[%s2 + $0x30] sm:$0xff]
    %v139 = vld [vmem:[%s2 + $0x38] sm:$0xff]
    %v140 = vld [vmem:[%s2 + $0x40] sm:$0xff]
    %v141 = vld [vmem:[%s2 + $0x48] sm:$0xff]
    %v142 = vld [vmem:[%s2 + $0x50] sm:$0xff]
    %v143 = vld [vmem:[%s2 + $0x58] sm:$0xff]
    %v144 = vld [vmem:[%s2 + $0x60] sm:$0xff]
    %v145 = vld [vmem:[%s2 + $0x68] sm:$0xff]
    %v146 = vld [vmem:[%s2 + $0x70] sm:$0xff]
    %v147 = vld [vmem:[%s2 + $0x78] sm:$0xff]
    %v164 = vunpack.c.l.b16 %v132
    %v165 = vunpack.c.h.b16 %v132
    %v166 = vunpack.c.l.b16 %v133
    %v167 = vunpack.c.h.b16 %v133
    %v168 = vunpack.c.l.b16 %v134
    %v169 = vunpack.c.h.b16 %v134
    %v170 = vunpack.c.l.b16 %v135
    %v171 = vunpack.c.h.b16 %v135
    %v172 = vunpack.c.l.b16 %v136
    %v173 = vunpack.c.h.b16 %v136
    %v174 = vunpack.c.l.b16 %v137
    %v175 = vunpack.c.h.b16 %v137
    %v176 = vunpack.c.l.b16 %v138
    %v177 = vunpack.c.h.b16 %v138
    %v178 = vunpack.c.l.b16 %v139
    %v179 = vunpack.c.h.b16 %v139
    %v180 = vunpack.c.l.b16 %v140
    %v181 = vunpack.c.h.b16 %v140
    %v182 = vunpack.c.l.b16 %v141
    %v183 = vunpack.c.h.b16 %v141
    %v184 = vunpack.c.l.b16 %v142
    %v185 = vunpack.c.h.b16 %v142
    %v186 = vunpack.c.l.b16 %v143
    %v187 = vunpack.c.h.b16 %v143
    %v188 = vunpack.c.l.b16 %v144
    %v189 = vunpack.c.h.b16 %v144
    %v190 = vunpack.c.l.b16 %v145
    %v191 = vunpack.c.h.b16 %v145
    %v192 = vunpack.c.l.b16 %v146
    %v193 = vunpack.c.h.b16 %v146
    %v194 = vunpack.c.l.b16 %v147
    %v195 = vunpack.c.h.b16 %v147
    %v196 = vpack.c.b16 %v166, %v164
    %v197 = vpack.c.b16 %v167, %v165
    %v198 = vpack.c.b16 %v170, %v168
    %v199 = vpack.c.b16 %v171, %v169
    %v200 = vpack.c.b16 %v174, %v172
    %v201 = vpack.c.b16 %v175, %v173
    %v202 = vpack.c.b16 %v178, %v176
    %v203 = vpack.c.b16 %v179, %v177
    %v204 = vpack.c.b16 %v182, %v180
    %v205 = vpack.c.b16 %v183, %v181
    %v206 = vpack.c.b16 %v186, %v184
    %v207 = vpack.c.b16 %v187, %v185
    %v208 = vpack.c.b16 %v190, %v188
    %v209 = vpack.c.b16 %v191, %v189
    %v210 = vpack.c.b16 %v194, %v192
    %v211 = vpack.c.b16 %v195, %v193
    %228 = vmatprep.subr.bf16.mxu0 %v197
    %229 = vmatpush1.bf16.msra.mxu0 %v196
    %230 = vmatprep.subr.bf16.mxu0 %v199
    %231 = vmatpush1.bf16.msra.mxu0 %v198
    %232 = vmatprep.subr.bf16.mxu0 %v201
    %233 = vmatpush1.bf16.msra.mxu0 %v200
    %234 = vmatprep.subr.bf16.mxu0 %v203
    %235 = vmatpush1.bf16.msra.mxu0 %v202
    %236 = vmatprep.subr.bf16.mxu0 %v205
    %237 = vmatpush1.bf16.msra.mxu0 %v204
    %238 = vmatprep.subr.bf16.mxu0 %v207
    %239 = vmatpush1.bf16.msra.mxu0 %v206
    %240 = vmatprep.subr.bf16.mxu0 %v209
    %241 = vmatpush1.bf16.msra.mxu0 %v208
    %242 = vmatprep.subr.bf16.mxu0 %v211
    %243 = vmatpush1.bf16.msra.mxu0 %v210
    %244 = vmatprep.subr.bf16.mxu0 0
    %245 = vmatpush1.bf16.msra.mxu0 0
    %246 = vmatprep.subr.bf16.mxu0 0
    %247 = vmatpush1.bf16.msra.mxu0 0
    %248 = vmatprep.subr.bf16.mxu0 0
    %249 = vmatpush1.bf16.msra.mxu0 0
    %250 = vmatprep.subr.bf16.mxu0 0
    %251 = vmatpush1.bf16.msra.mxu0 0
    %252 = vmatprep.subr.bf16.mxu0 0
    %253 = vmatpush1.bf16.msra.mxu0 0
    %254 = vmatprep.subr.bf16.mxu0 0
    %255 = vmatpush1.bf16.msra.mxu0 0
    %256 = vmatprep.subr.bf16.mxu0 0
    %257 = vmatpush1.bf16.msra.mxu0 0
    %258 = vmatprep.subr.bf16.mxu0 0
    %259 = vmatpush1.bf16.msra.mxu0 0
    %260 = vmatprep.mubr.bf16.mxu0 0
    %261 = vmatmul.mubr.bf16.gmra.mrb[0].mxu0 %v131
    %v262 = vpop.f32.mrb[0].mxu0
    %v263 = vadd.f32 0.0, %v262
    %v264 = vpop.f32.mrb[0].mxu0
    %v265 = vadd.f32 0.0, %v264
    %v266 = vpop.f32.mrb[0].mxu0
    %v267 = vadd.f32 0.0, %v266
    %v268 = vpop.f32.mrb[0].mxu0
    %v269 = vadd.f32 0.0, %v268
    %270 = vdwg.mxu0
    %271 = vst [vmem:[#allocation2] sm:$0xff] %v263
    %272 = vst [vmem:[#allocation2 + $0x8] sm:$0xff] %v265
    %273 = vst [vmem:[#allocation2 + $0x10] sm:$0xff] %v267
    %274 = vst [vmem:[#allocation2 + $0x18] sm:$0xff] %v269
    // Predicated region
    $region14: #{seq2seq_model_forward.7} parent=1 // pred_check
      _
    $region15: #{seq2seq_model_forward.7} parent=1 // pred_check_branch
      %276 = sbr.rel (0) target = $region17
    $region16: #{seq2seq_model_forward.7} parent=1 // pred_region
      %s278 = ssub.s32 512, 512
      %279 = vsyncadd [#allocation3], %s278
      %s280 = sshll.u32 [#allocation2], 4
      %s281 = int_to_ptr.vmem [resolvable:$true] %s280
      %286 = dma.vmem_to_hbm [thread:$0]  %s281, 512, %s3, [#allocation3], 256, 256, 16
    $region17: #{seq2seq_model_forward.7} parent=1 // pred_fallthru
      _
    // Predicated region
    $region18: #{seq2seq_model_forward.7} parent=1 // pred_check
      _
    $region19: #{seq2seq_model_forward.7} parent=1 // pred_check_branch
      %288 = sbr.rel (0) target = $region21
    $region20: #{seq2seq_model_forward.7} parent=1 // pred_region
      %289 = dma.done [#allocation3], 512
    $region21: #{seq2seq_model_forward.7} parent=1 // pred_fallthru
      _
    %290 = vsyncpa [#allocation3], 1

</llo_original>
